<compile_context>
chip_gen: v5e
topology: v5e:2x2
jax: 0.10.0
libtpu: 0.0.40
codegen_flags: <defaults>
</compile_context>

<pallas_src>
import functools
import math

import jax
import jax.numpy as jnp
from jax import lax
from jax.experimental import pallas as pl
from jax.experimental.pallas import tpu as pltpu

_LN_EPS = 1e-5  # torch.nn.LayerNorm default


# ----------------------------------------------------------------------------
# Single fused kernel: all transformer blocks + pooling + head.
#   grid = (num_batch_tiles, n_blocks)   ("parallel", "arbitrary")
# ----------------------------------------------------------------------------
def _transformer_kernel(x_ref, lnag_ref, lnab_ref, wqkv_ref, bqkv_ref,
                        wo_ref, bo_ref, lnfg_ref, lnfb_ref,
                        w1_ref, b1_ref, w2_ref, b2_ref,
                        hlng_ref, hlnb_ref, hw_ref, hb_ref,
                        o_ref, x_scr, qkv_scr, attn_scr,
                        *, n_heads, n_blocks, seq, seq_pad, tb,
                        prenorm, first_prenorm, pooling):
    f32 = jnp.float32
    blk = pl.program_id(1)
    d = x_ref.shape[-1]
    dh = d // n_heads
    scale = 1.0 / math.sqrt(dh)
    cdt = wqkv_ref.dtype                     # matmul-operand (parameter) dtype

    def layer_norm(v, g, b):
        mu = jnp.mean(v, axis=-1, keepdims=True)
        var = jnp.mean(jnp.square(v - mu), axis=-1, keepdims=True)
        return (v - mu) * lax.rsqrt(var + _LN_EPS) * g + b

    # ---- load the batch tile into the carried f32 activation scratch ------
    @pl.when(blk == 0)
    def _init():
        if seq_pad != seq:                   # keep padding rows deterministic
            x_scr[...] = jnp.zeros((tb * seq_pad, d), f32)
            attn_scr[...] = jnp.zeros((tb * seq_pad, d), cdt)
        for b in range(tb):
            x_scr[b * seq_pad:b * seq_pad + seq, :] = x_ref[b].astype(f32)

    x2d = x_scr[...]                         # [TB*S_pad, d]  f32 (carried)

    lnag = lnag_ref[0].astype(f32)
    lnab = lnab_ref[0].astype(f32)
    lnfg = lnfg_ref[0].astype(f32)
    lnfb = lnfb_ref[0].astype(f32)

    # --------------------------- attention stage ---------------------------
    if prenorm:
        x_res = layer_norm(x2d, lnag, lnab)
        if not first_prenorm:                # block 0 uses Identity norm
            x_res = jnp.where(blk == 0, x2d, x_res)
    else:
        x_res = x2d

    # fused QKV projection: single lane-dense [TB*S, d] @ [d, 3d] matmul
    qkv = jnp.dot(x_res.astype(cdt), wqkv_ref[0], preferred_element_type=f32)
    qkv_scr[...] = (qkv + bqkv_ref[0].astype(f32)).astype(cdt)

    # per-(sample, head) attention; each head written at its lane offset
    for b in range(tb):
        r = b * seq_pad
        for h in range(n_heads):
            c = h * dh
            q = qkv_scr[r:r + seq, c:c + dh]
            k = qkv_scr[r:r + seq, d + c:d + c + dh]
            v = qkv_scr[r:r + seq, 2 * d + c:2 * d + c + dh]
            logits = lax.dot_general(q, k, (((1,), (1,)), ((), ())),
                                     preferred_element_type=f32) * scale
            m = jnp.max(logits, axis=-1, keepdims=True)
            e = jnp.exp(logits - m)
            l = jnp.sum(e, axis=-1, keepdims=True)
            # normalize AFTER the PV matmul ([S,dh] mul, EUP reciprocal)
            pv = jnp.dot(e.astype(cdt), v, preferred_element_type=f32)
            attn_scr[r:r + seq, c:c + dh] = (
                pv * pl.reciprocal(l, approx=True)).astype(cdt)

    # single lane-dense output projection over the concatenated heads
    attn = jnp.dot(attn_scr[...], wo_ref[0], preferred_element_type=f32)
    x2d = x2d + attn + bo_ref[0].astype(f32)
    if not prenorm:
        x2d = layer_norm(x2d, lnag, lnab)

    # ------------------------------ FFN stage ------------------------------
    x_res = layer_norm(x2d, lnfg, lnfb) if prenorm else x2d
    h1 = jnp.dot(x_res.astype(cdt), w1_ref[0], preferred_element_type=f32)
    h1 = jnp.maximum(h1 + b1_ref[0].astype(f32), 0.0)      # ffn act = ReLU
    y = jnp.dot(h1.astype(cdt), w2_ref[0], preferred_element_type=f32)
    x2d = x2d + y + b2_ref[0].astype(f32)
    if not prenorm:
        x2d = layer_norm(x2d, lnfg, lnfb)

    x_scr[...] = x2d                         # carry to the next block step

    # ------------- pooling + head, fused into the last block step ----------
    @pl.when(blk == n_blocks - 1)
    def _finish():
        if pooling == 'avg':
            rows = [jnp.mean(x2d[b * seq_pad:b * seq_pad + seq, :],
                             axis=0, keepdims=True) for b in range(tb)]
        else:                                # 'cls' / 'first-token': token 0
            rows = [x2d[b * seq_pad:b * seq_pad + 1, :] for b in range(tb)]
        pooled = jnp.concatenate(rows, axis=0)              # [TB, d]
        if prenorm:
            pooled = layer_norm(pooled, hlng_ref[...].astype(f32),
                                hlnb_ref[...].astype(f32))
        pooled = jnp.maximum(pooled, 0.0)                   # head act = ReLU
        out = jnp.dot(pooled.astype(cdt), hw_ref[...],
                      preferred_element_type=f32) + hb_ref[...].astype(f32)
        o_ref[0] = out.astype(o_ref.dtype)


# ----------------------------------------------------------------------------
# Wrapper: one pallas_call for the whole transformer.
# ----------------------------------------------------------------------------
def transformer_forward(params, x, cfg, *, batch_tile=8):
    prenorm = cfg['prenormalization']
    first_prenorm = cfg['first_prenormalization']
    pooling = cfg['pooling']
    H = cfg['n_heads']
    n_blocks = cfg['n_blocks']

    B, _, d = x.shape
    if pooling == 'cls':
        cls = jnp.broadcast_to(params['cls'].reshape(1, 1, d).astype(x.dtype),
                               (B, 1, d))
        x = jnp.concatenate([cls, x], axis=1)
    _, S, _ = x.shape

    blocks = params['blocks']
    head = params['head']
    hid = blocks[0]['w1'].shape[1]
    d_out = head['w'].shape[1]
    cdt = blocks[0]['wq'].dtype

    # ---- batch tiling ------------------------------------------------------
    TB = max(1, min(batch_tile, B))
    num_bt = -(-B // TB)
    B_pad = num_bt * TB
    if B_pad != B:
        x = jnp.concatenate(
            [x, jnp.zeros((B_pad - B, S, d), x.dtype)], axis=0)
    S_pad = -(-S // 8) * 8                   # per-sample row stride in scratch

    row = lambda v: v.reshape(1, -1)

    # ---- stacked per-block parameters (streamed over the block grid axis) --
    wqkv = jnp.stack([jnp.concatenate([bp['wq'], bp['wk'], bp['wv']], axis=1)
                      for bp in blocks])                       # [nb, d, 3d]
    bqkv = jnp.stack([row(jnp.concatenate([bp['bq'], bp['bk'], bp['bv']]))
                      for bp in blocks])                       # [nb, 1, 3d]
    wo = jnp.stack([bp['wo'] for bp in blocks])                # [nb, d, d]
    bo = jnp.stack([row(bp['bo']) for bp in blocks])
    lnag = jnp.stack([row(bp['ln_attn_g']) for bp in blocks])
    lnab = jnp.stack([row(bp['ln_attn_b']) for bp in blocks])
    lnfg = jnp.stack([row(bp['ln_ffn_g']) for bp in blocks])
    lnfb = jnp.stack([row(bp['ln_ffn_b']) for bp in blocks])
    w1 = jnp.stack([bp['w1'] for bp in blocks])                # [nb, d, hid]
    b1 = jnp.stack([row(bp['b1']) for bp in blocks])
    w2 = jnp.stack([bp['w2'] for bp in blocks])                # [nb, hid, d]
    b2 = jnp.stack([row(bp['b2']) for bp in blocks])

    args = [x, lnag, lnab, wqkv, bqkv, wo, bo, lnfg, lnfb, w1, b1, w2, b2,
            row(head['ln_g']), row(head['ln_b']), head['w'], row(head['b'])]

    def per_block_spec(a):                   # streamed over the block axis
        shape = (1,) + a.shape[1:]
        nd = a.ndim
        return pl.BlockSpec(shape,
                            lambda bt, blk, _nd=nd: (blk,) + (0,) * (_nd - 1))

    def const_spec(a):                       # VMEM-resident (head params)
        nd = a.ndim
        return pl.BlockSpec(a.shape, lambda bt, blk, _nd=nd: (0,) * _nd)

    in_specs = [pl.BlockSpec((TB, S, d), lambda bt, blk: (bt, 0, 0))]
    in_specs += [per_block_spec(a) for a in args[1:13]]
    in_specs += [const_spec(a) for a in args[13:]]

    out_shape = jax.ShapeDtypeStruct((num_bt, TB, d_out), x.dtype)
    out_spec = pl.BlockSpec((1, TB, d_out), lambda bt, blk: (bt, 0, 0))

    scratch_shapes = [
        pltpu.VMEM((TB * S_pad, d), jnp.float32),   # carried activation
        pltpu.VMEM((TB * S_pad, 3 * d), cdt),       # fused QKV
        pltpu.VMEM((TB * S_pad, d), cdt),           # concatenated head outputs
    ]

    kernel = functools.partial(
        _transformer_kernel, n_heads=H, n_blocks=n_blocks, seq=S,
        seq_pad=S_pad, tb=TB, prenorm=prenorm, first_prenorm=first_prenorm,
        pooling=pooling)

    # ---- VMEM budget (double-buffered pipeline blocks + scratches) ---------
    def _nbytes(shape, dt):
        return int(math.prod(shape)) * jnp.dtype(dt).itemsize

    step_bytes = _nbytes((TB, S, d), x.dtype)
    step_bytes += sum(_nbytes(a.shape[1:], a.dtype) for a in args[1:13])
    step_bytes += sum(_nbytes(a.shape, a.dtype) for a in args[13:])
    step_bytes += _nbytes((TB, d_out), x.dtype)
    scratch_bytes = sum(_nbytes(s.shape, s.dtype) for s in scratch_shapes)
    vmem_limit = int(min(max(2 * (2 * step_bytes + scratch_bytes),
                             16 * 2 ** 20), 64 * 2 ** 20))

    # ---- advisory cost estimate --------------------------------------------
    tokens = B_pad * S
    flops_block = (2 * tokens * d * 3 * d                     # fused QKV
                   + 2 * 2 * B_pad * H * S * S * (d // H)     # logits + PV
                   + 2 * tokens * d * d                       # out projection
                   + 2 * 2 * tokens * d * hid)                # FFN
    cost = pl.CostEstimate(
        flops=int(n_blocks * flops_block + 2 * B_pad * d * d_out),
        transcendentals=int(n_blocks * B_pad * H * S * S),
        bytes_accessed=int(x.size * x.dtype.itemsize
                           + num_bt * sum(int(a.size) * a.dtype.itemsize
                                          for a in args[1:])
                           + B_pad * d_out * x.dtype.itemsize))

    out = pl.pallas_call(
        kernel,
        out_shape=out_shape,
        grid_spec=pltpu.PrefetchScalarGridSpec(
            num_scalar_prefetch=0,
            grid=(num_bt, n_blocks),
            in_specs=in_specs,
            out_specs=out_spec,
            scratch_shapes=scratch_shapes),
        compiler_params=pltpu.CompilerParams(
            dimension_semantics=("parallel", "arbitrary"),
            vmem_limit_bytes=vmem_limit),
        cost_estimate=cost,
    )(*args)

    return out.reshape(B_pad, d_out)[:B]


# ----------------------------------------------------------------------------
# Parameter init (matches the PyTorch module's layer shapes).
# ----------------------------------------------------------------------------
def init_transformer_params(key, cfg, dtype=jnp.float32):
    d = cfg['d_embedding']
    hid = cfg['ffn_d_hidden']
    d_out = cfg['d_out']

    def linear(k, fan_in, fan_out):
        kw, kb = jax.random.split(k)
        bound = 1.0 / math.sqrt(fan_in)
        w = jax.random.uniform(kw, (fan_in, fan_out), dtype, -bound, bound)
        b = jax.random.uniform(kb, (fan_out,), dtype, -bound, bound)
        return w, b

    params = {'blocks': []}
    if cfg['pooling'] == 'cls':
        key, k = jax.random.split(key)
        bnd = 1.0 / math.sqrt(d)
        params['cls'] = jax.random.uniform(k, (d,), dtype, -bnd, bnd)
    for _ in range(cfg['n_blocks']):
        keys = jax.random.split(key, 12)
        key = keys[0]
        bp = {}
        bp['wq'], bp['bq'] = linear(keys[1], d, d)
        bp['wk'], bp['bk'] = linear(keys[2], d, d)
        bp['wv'], bp['bv'] = linear(keys[3], d, d)
        bp['wo'], bp['bo'] = linear(keys[4], d, d)
        bp['w1'], bp['b1'] = linear(keys[5], d, hid)
        bp['w2'], bp['b2'] = linear(keys[6], hid, d)
        bp['ln_attn_g'] = 1.0 + 0.1 * jax.random.normal(keys[7], (d,), dtype)
        bp['ln_attn_b'] = 0.1 * jax.random.normal(keys[8], (d,), dtype)
        bp['ln_ffn_g'] = 1.0 + 0.1 * jax.random.normal(keys[9], (d,), dtype)
        bp['ln_ffn_b'] = 0.1 * jax.random.normal(keys[10], (d,), dtype)
        params['blocks'].append(bp)
    keys = jax.random.split(key, 4)
    hw, hb = linear(keys[1], d, d_out)
    params['head'] = {
        'w': hw, 'b': hb,
        'ln_g': 1.0 + 0.1 * jax.random.normal(keys[2], (d,), dtype),
        'ln_b': 0.1 * jax.random.normal(keys[3], (d,), dtype),
    }
    return params


# ----------------------------------------------------------------------------
# Pure-JAX reference (mirrors the PyTorch forward) for validation.
# ----------------------------------------------------------------------------
def _layernorm_ref(x, g, b):
    mu = x.mean(-1, keepdims=True)
    var = ((x - mu) ** 2).mean(-1, keepdims=True)
    return (x - mu) / jnp.sqrt(var + _LN_EPS) * g + b


def _softmax_ref(z):
    m = jnp.max(z, axis=-1, keepdims=True)
    e = jnp.exp(z - m)
    return e / jnp.sum(e, axis=-1, keepdims=True)


def _mha_ref(xq, xkv, p, n_heads):
    q = xq @ p['wq'] + p['bq']
    k = xkv @ p['wk'] + p['bk']
    v = xkv @ p['wv'] + p['bv']
    B, Tq, d = q.shape
    dh = d // n_heads

    def split(t):
        Bt, T, _ = t.shape
        return t.reshape(Bt, T, n_heads, dh).transpose(0, 2, 1, 3)

    qh, kh, vh = split(q), split(k), split(v)
    logits = jnp.einsum('bhqd,bhkd->bhqk', qh, kh) / math.sqrt(dh)
    probs = _softmax_ref(logits)
    out = jnp.einsum('bhqk,bhkd->bhqd', probs, vh)
    out = out.transpose(0, 2, 1, 3).reshape(B, Tq, d)
    return out @ p['wo'] + p['bo']


def _block_ref(x, p, *, n_heads, prenorm, attn_norm_identity, pool_token):
    x_res = x
    if prenorm and not attn_norm_identity:
        x_res = _layernorm_ref(x_res, p['ln_attn_g'], p['ln_attn_b'])
    if pool_token:
        attn = _mha_ref(x_res[:, 0:1], x_res, p, n_heads)
        x = x[:, 0:1]
    else:
        attn = _mha_ref(x_res, x_res, p, n_heads)
    x = x + attn
    if not prenorm:
        x = _layernorm_ref(x, p['ln_attn_g'], p['ln_attn_b'])
    x_res = _layernorm_ref(x, p['ln_ffn_g'], p['ln_ffn_b']) if prenorm else x
    h = jnp.maximum(x_res @ p['w1'] + p['b1'], 0.0)
    h = h @ p['w2'] + p['b2']
    x = x + h
    if not prenorm:
        x = _layernorm_ref(x, p['ln_ffn_g'], p['ln_ffn_b'])
    return x


def transformer_forward_ref(params, x, cfg):
    B = x.shape[0]
    d = cfg['d_embedding']
    if cfg['pooling'] == 'cls':
        cls = jnp.broadcast_to(params['cls'].reshape(1, 1, d), (B, 1, d))
        x = jnp.concatenate([cls.astype(x.dtype), x], axis=1)
    n_blocks = cfg['n_blocks']
    for i, bp in enumerate(params['blocks']):
        attn_norm_identity = (cfg['prenormalization'] and i == 0
                              and not cfg['first_prenormalization'])
        pool_token = (cfg['pooling'] != 'avg') and (i == n_blocks - 1)
        x = _block_ref(x, bp, n_heads=cfg['n_heads'],
                       prenorm=cfg['prenormalization'],
                       attn_norm_identity=attn_norm_identity,
                       pool_token=pool_token)
    xp = jnp.mean(x, axis=1) if cfg['pooling'] == 'avg' else x[:, 0]
    hp = params['head']
    if cfg['prenormalization']:
        xp = _layernorm_ref(xp, hp['ln_g'], hp['ln_b'])
    xp = jnp.maximum(xp, 0.0)
    return xp @ hp['w'] + hp['b']


if __name__ == "__main__":
    cfg = dict(
        d_embedding=32, d_out=16, n_blocks=2, n_heads=4, ffn_d_hidden=64,
        prenormalization=True, first_prenormalization=False, pooling='cls',
        # attention/ffn/head normalization = LayerNorm, activations = ReLU,
        # all dropouts = identity (eval mode).
    )
    batch, seq = 2, 8

    key = jax.random.PRNGKey(0)
    kx, kp = jax.random.split(key)
    x = jax.random.normal(kx, (batch, seq, cfg['d_embedding']), jnp.float32)
    params = init_transformer_params(kp, cfg)

    fwd = jax.jit(lambda p, inp: transformer_forward(p, inp, cfg))
    out = jax.block_until_ready(fwd(params, x))

    ref = transformer_forward_ref(params, x, cfg)
    assert out.shape == (batch, cfg['d_out'])
    max_diff = float(jnp.max(jnp.abs(out - ref)))
    # Tolerance 1e-2: the only deliberate numerical deviation from the pure
    # f32 reference is the EUP approximate reciprocal in the softmax denom.
    assert jnp.allclose(out, ref, atol=1e-2, rtol=1e-2), (
        f"mismatch vs reference, max abs diff = {max_diff}")

    print("KERNEL_OK")
</pallas_src>

<mosaic_0001>
module attributes {stable_mosaic.version = 11 : i64} {
  func.func @_transformer_kernel(%arg0: i32, %arg1: i32, %arg2: memref<2x9x32xf32, #tpu.memory_space<vmem>>, %arg3: memref<1x1x32xf32, #tpu.memory_space<vmem>>, %arg4: memref<1x1x32xf32, #tpu.memory_space<vmem>>, %arg5: memref<1x32x96xf32, #tpu.memory_space<vmem>>, %arg6: memref<1x1x96xf32, #tpu.memory_space<vmem>>, %arg7: memref<1x32x32xf32, #tpu.memory_space<vmem>>, %arg8: memref<1x1x32xf32, #tpu.memory_space<vmem>>, %arg9: memref<1x1x32xf32, #tpu.memory_space<vmem>>, %arg10: memref<1x1x32xf32, #tpu.memory_space<vmem>>, %arg11: memref<1x32x64xf32, #tpu.memory_space<vmem>>, %arg12: memref<1x1x64xf32, #tpu.memory_space<vmem>>, %arg13: memref<1x64x32xf32, #tpu.memory_space<vmem>>, %arg14: memref<1x1x32xf32, #tpu.memory_space<vmem>>, %arg15: memref<1x32xf32, #tpu.memory_space<vmem>>, %arg16: memref<1x32xf32, #tpu.memory_space<vmem>>, %arg17: memref<32x16xf32, #tpu.memory_space<vmem>>, %arg18: memref<1x16xf32, #tpu.memory_space<vmem>>, %arg19: memref<1x2x16xf32, #tpu.memory_space<vmem>>, %arg20: memref<32x32xf32, #tpu.memory_space<vmem>>, %arg21: memref<32x96xf32, #tpu.memory_space<vmem>>, %arg22: memref<32x32xf32, #tpu.memory_space<vmem>>) attributes {dimension_semantics = [#tpu.dimension_semantics<parallel>, #tpu.dimension_semantics<arbitrary>], iteration_bounds = array<i64: 1, 2>, scalar_prefetch = 0 : i64, scratch_operands = 3 : i64, tpu.core_type = #tpu.core_type<tc>, window_params = [{transform_indices = @transform_0, window_bounds = array<i64: 2, 9, 32>}, {transform_indices = @transform_1, window_bounds = array<i64: 1, 1, 32>}, {transform_indices = @transform_2, window_bounds = array<i64: 1, 1, 32>}, {transform_indices = @transform_3, window_bounds = array<i64: 1, 32, 96>}, {transform_indices = @transform_4, window_bounds = array<i64: 1, 1, 96>}, {transform_indices = @transform_5, window_bounds = array<i64: 1, 32, 32>}, {transform_indices = @transform_6, window_bounds = array<i64: 1, 1, 32>}, {transform_indices = @transform_7, window_bounds = array<i64: 1, 1, 32>}, {transform_indices = @transform_8, window_bounds = array<i64: 1, 1, 32>}, {transform_indices = @transform_9, window_bounds = array<i64: 1, 32, 64>}, {transform_indices = @transform_10, window_bounds = array<i64: 1, 1, 64>}, {transform_indices = @transform_11, window_bounds = array<i64: 1, 64, 32>}, {transform_indices = @transform_12, window_bounds = array<i64: 1, 1, 32>}, {pipeline_mode = #tpu.pipeline_mode<synchronous>, transform_indices = @transform_13, window_bounds = array<i64: 1, 32>}, {pipeline_mode = #tpu.pipeline_mode<synchronous>, transform_indices = @transform_14, window_bounds = array<i64: 1, 32>}, {pipeline_mode = #tpu.pipeline_mode<synchronous>, transform_indices = @transform_15, window_bounds = array<i64: 32, 16>}, {pipeline_mode = #tpu.pipeline_mode<synchronous>, transform_indices = @transform_16, window_bounds = array<i64: 1, 16>}, {transform_indices = @transform_17, window_bounds = array<i64: 1, 2, 16>}]} {
    %c0_i32 = arith.constant 0 : i32
    %0 = arith.cmpi eq, %arg1, %c0_i32 : i32
    %1 = arith.extui %0 : i1 to i32
    %c0_i32_0 = arith.constant 0 : i32
    %2 = arith.cmpi ne, %1, %c0_i32_0 : i32
    scf.if %2 {
      %cst_153 = arith.constant 0.000000e+00 : f32
      %240 = vector.broadcast %cst_153 : f32 to vector<32x32xf32>
      %c0_154 = arith.constant 0 : index
      %c0_155 = arith.constant 0 : index
      %241 = vector.load %arg20[%c0_154, %c0_155] : memref<32x32xf32, #tpu.memory_space<vmem>>, vector<32x32xf32>
      tpu.vector_store %arg20[%c0_154, %c0_155], %240 {strides = array<i32>} : memref<32x32xf32, #tpu.memory_space<vmem>>, vector<32x32xf32>,
      %cst_156 = arith.constant 0.000000e+00 : f32
      %242 = vector.broadcast %cst_156 : f32 to vector<32x32xf32>
      %c0_157 = arith.constant 0 : index
      %c0_158 = arith.constant 0 : index
      %243 = vector.load %arg22[%c0_157, %c0_158] : memref<32x32xf32, #tpu.memory_space<vmem>>, vector<32x32xf32>
      tpu.vector_store %arg22[%c0_157, %c0_158], %242 {strides = array<i32>} : memref<32x32xf32, #tpu.memory_space<vmem>>, vector<32x32xf32>,
      %c0_159 = arith.constant 0 : index
      %c0_160 = arith.constant 0 : index
      %c0_161 = arith.constant 0 : index
      %244 = vector.load %arg2[%c0_159, %c0_160, %c0_161] : memref<2x9x32xf32, #tpu.memory_space<vmem>>, vector<1x9x32xf32>
      %245 = vector.shape_cast %244 : vector<1x9x32xf32> to vector<9x32xf32>
      %c0_162 = arith.constant 0 : index
      %c0_163 = arith.constant 0 : index
      %246 = vector.load %arg20[%c0_162, %c0_163] : memref<32x32xf32, #tpu.memory_space<vmem>>, vector<9x32xf32>
      tpu.vector_store %arg20[%c0_162, %c0_163], %245 {strides = array<i32>} : memref<32x32xf32, #tpu.memory_space<vmem>>, vector<9x32xf32>,
      %c1 = arith.constant 1 : index
      %c0_164 = arith.constant 0 : index
      %c0_165 = arith.constant 0 : index
      %247 = vector.load %arg2[%c1, %c0_164, %c0_165] : memref<2x9x32xf32, #tpu.memory_space<vmem>>, vector<1x9x32xf32>
      %248 = vector.shape_cast %247 : vector<1x9x32xf32> to vector<9x32xf32>
      %c16_166 = arith.constant 16 : index
      %c0_167 = arith.constant 0 : index
      %249 = vector.load %arg20[%c16_166, %c0_167] : memref<32x32xf32, #tpu.memory_space<vmem>>, vector<9x32xf32>
      tpu.vector_store %arg20[%c16_166, %c0_167], %248 {strides = array<i32>} : memref<32x32xf32, #tpu.memory_space<vmem>>, vector<9x32xf32>,
    } else {
    }
    %c0 = arith.constant 0 : index
    %c0_1 = arith.constant 0 : index
    %3 = vector.load %arg20[%c0, %c0_1] : memref<32x32xf32, #tpu.memory_space<vmem>>, vector<32x32xf32>
    %c0_2 = arith.constant 0 : index
    %c0_3 = arith.constant 0 : index
    %c0_4 = arith.constant 0 : index
    %4 = vector.load %arg3[%c0_2, %c0_3, %c0_4] : memref<1x1x32xf32, #tpu.memory_space<vmem>>, vector<1x1x32xf32>
    %5 = vector.shape_cast %4 : vector<1x1x32xf32> to vector<1x32xf32>
    %c0_5 = arith.constant 0 : index
    %c0_6 = arith.constant 0 : index
    %c0_7 = arith.constant 0 : index
    %6 = vector.load %arg4[%c0_5, %c0_6, %c0_7] : memref<1x1x32xf32, #tpu.memory_space<vmem>>, vector<1x1x32xf32>
    %7 = vector.shape_cast %6 : vector<1x1x32xf32> to vector<1x32xf32>
    %c0_8 = arith.constant 0 : index
    %c0_9 = arith.constant 0 : index
    %c0_10 = arith.constant 0 : index
    %8 = vector.load %arg9[%c0_8, %c0_9, %c0_10] : memref<1x1x32xf32, #tpu.memory_space<vmem>>, vector<1x1x32xf32>
    %9 = vector.shape_cast %8 : vector<1x1x32xf32> to vector<1x32xf32>
    %c0_11 = arith.constant 0 : index
    %c0_12 = arith.constant 0 : index
    %c0_13 = arith.constant 0 : index
    %10 = vector.load %arg10[%c0_11, %c0_12, %c0_13] : memref<1x1x32xf32, #tpu.memory_space<vmem>>, vector<1x1x32xf32>
    %11 = vector.shape_cast %10 : vector<1x1x32xf32> to vector<1x32xf32>
    %cst = arith.constant dense<0.000000e+00> : vector<32xf32>
    %12 = vector.multi_reduction <add>, %3, %cst [1] : vector<32x32xf32> to vector<32xf32>
    %13 = vector.shape_cast %12 : vector<32xf32> to vector<32x1xf32>
    %cst_14 = arith.constant 3.200000e+01 : f32
    %14 = vector.broadcast %cst_14 : f32 to vector<32x1xf32>
    %15 = arith.divf %13, %14 : vector<32x1xf32>
    %16 = vector.broadcast %15 : vector<32x1xf32> to vector<32x32xf32>
    %17 = arith.subf %3, %16 : vector<32x32xf32>
    %18 = arith.mulf %17, %17 : vector<32x32xf32>
    %cst_15 = arith.constant dense<0.000000e+00> : vector<32xf32>
    %19 = vector.multi_reduction <add>, %18, %cst_15 [1] : vector<32x32xf32> to vector<32xf32>
    %20 = vector.shape_cast %19 : vector<32xf32> to vector<32x1xf32>
    %cst_16 = arith.constant 3.200000e+01 : f32
    %21 = vector.broadcast %cst_16 : f32 to vector<32x1xf32>
    %22 = arith.divf %20, %21 : vector<32x1xf32>
    %23 = vector.broadcast %15 : vector<32x1xf32> to vector<32x32xf32>
    %24 = arith.subf %3, %23 : vector<32x32xf32>
    %cst_17 = arith.constant 9.99999974E-6 : f32
    %25 = vector.broadcast %cst_17 : f32 to vector<32x1xf32>
    %26 = arith.addf %22, %25 : vector<32x1xf32>
    %27 = math.rsqrt %26 : vector<32x1xf32>
    %28 = vector.broadcast %27 : vector<32x1xf32> to vector<32x32xf32>
    %29 = arith.mulf %24, %28 : vector<32x32xf32>
    %30 = vector.broadcast %5 : vector<1x32xf32> to vector<32x32xf32>
    %31 = arith.mulf %29, %30 : vector<32x32xf32>
    %32 = vector.broadcast %7 : vector<1x32xf32> to vector<32x32xf32>
    %33 = arith.addf %31, %32 : vector<32x32xf32>
    %c0_i32_18 = arith.constant 0 : i32
    %34 = arith.cmpi eq, %arg1, %c0_i32_18 : i32
    %35 = arith.select %34, %3, %33 : vector<32x32xf32>
    %c0_19 = arith.constant 0 : index
    %c0_20 = arith.constant 0 : index
    %c0_21 = arith.constant 0 : index
    %36 = vector.load %arg5[%c0_19, %c0_20, %c0_21] : memref<1x32x96xf32, #tpu.memory_space<vmem>>, vector<1x32x96xf32>
    %37 = vector.shape_cast %36 : vector<1x32x96xf32> to vector<32x96xf32>
    %cst_22 = arith.constant dense<0.000000e+00> : vector<32x96xf32>
    %38 = tpu.matmul %35, %37, %cst_22 {dimension_numbers = #tpu.dot_dimension_numbers<[1], [0], [0], [1], [0, 0, 1, 1], [], []>} : vector<32x32xf32>, vector<32x96xf32>, vector<32x96xf32> -> vector<32x96xf32>
    %c0_23 = arith.constant 0 : index
    %c0_24 = arith.constant 0 : index
    %c0_25 = arith.constant 0 : index
    %39 = vector.load %arg6[%c0_23, %c0_24, %c0_25] : memref<1x1x96xf32, #tpu.memory_space<vmem>>, vector<1x1x96xf32>
    %40 = vector.shape_cast %39 : vector<1x1x96xf32> to vector<1x96xf32>
    %41 = vector.broadcast %40 : vector<1x96xf32> to vector<32x96xf32>
    %42 = arith.addf %38, %41 : vector<32x96xf32>
    %c0_26 = arith.constant 0 : index
    %c0_27 = arith.constant 0 : index
    %43 = vector.load %arg21[%c0_26, %c0_27] : memref<32x96xf32, #tpu.memory_space<vmem>>, vector<32x96xf32>
    tpu.vector_store %arg21[%c0_26, %c0_27], %42 {strides = array<i32>} : memref<32x96xf32, #tpu.memory_space<vmem>>, vector<32x96xf32>,
    %c0_28 = arith.constant 0 : index
    %c0_29 = arith.constant 0 : index
    %44 = vector.load %arg21[%c0_28, %c0_29] : memref<32x96xf32, #tpu.memory_space<vmem>>, vector<9x8xf32>
    %c0_30 = arith.constant 0 : index
    %c32 = arith.constant 32 : index
    %45 = vector.load %arg21[%c0_30, %c32] : memref<32x96xf32, #tpu.memory_space<vmem>>, vector<9x8xf32>
    %c0_31 = arith.constant 0 : index
    %c64 = arith.constant 64 : index
    %46 = vector.load %arg21[%c0_31, %c64] : memref<32x96xf32, #tpu.memory_space<vmem>>, vector<9x8xf32>
    %cst_32 = arith.constant dense<0.000000e+00> : vector<9x9xf32>
    %47 = tpu.matmul %44, %45, %cst_32 {dimension_numbers = #tpu.dot_dimension_numbers<[1], [1], [0], [0], [0, 0, 1, 0], [], []>} : vector<9x8xf32>, vector<9x8xf32>, vector<9x9xf32> -> vector<9x9xf32>
    %cst_33 = arith.constant 0.353553385 : f32
    %48 = vector.broadcast %cst_33 : f32 to vector<9x9xf32>
    %49 = arith.mulf %47, %48 : vector<9x9xf32>
    %cst_34 = arith.constant dense<0xFF800000> : vector<9xf32>
    %50 = vector.multi_reduction <maximumf>, %49, %cst_34 [1] : vector<9x9xf32> to vector<9xf32>
    %51 = vector.shape_cast %50 : vector<9xf32> to vector<9x1xf32>
    %52 = vector.broadcast %51 : vector<9x1xf32> to vector<9x9xf32>
    %53 = arith.subf %49, %52 : vector<9x9xf32>
    %54 = math.exp %53 : vector<9x9xf32>
    %cst_35 = arith.constant dense<0.000000e+00> : vector<9xf32>
    %55 = vector.multi_reduction <add>, %54, %cst_35 [1] : vector<9x9xf32> to vector<9xf32>
    %56 = vector.shape_cast %55 : vector<9xf32> to vector<9x1xf32>
    %cst_36 = arith.constant dense<0.000000e+00> : vector<9x8xf32>
    %57 = tpu.matmul %54, %46, %cst_36 {dimension_numbers = #tpu.dot_dimension_numbers<[1], [0], [0], [1], [0, 0, 1, 1], [], []>} : vector<9x9xf32>, vector<9x8xf32>, vector<9x8xf32> -> vector<9x8xf32>
    %58 = tpu.reciprocal %56 {approx = true} : vector<9x1xf32> -> vector<9x1xf32>
    %59 = vector.broadcast %58 : vector<9x1xf32> to vector<9x8xf32>
    %60 = arith.mulf %57, %59 : vector<9x8xf32>
    %c0_37 = arith.constant 0 : index
    %c0_38 = arith.constant 0 : index
    %61 = vector.load %arg22[%c0_37, %c0_38] : memref<32x32xf32, #tpu.memory_space<vmem>>, vector<9x8xf32>
    tpu.vector_store %arg22[%c0_37, %c0_38], %60 {strides = array<i32>} : memref<32x32xf32, #tpu.memory_space<vmem>>, vector<9x8xf32>,
    %c0_39 = arith.constant 0 : index
    %c8 = arith.constant 8 : index
    %62 = vector.load %arg21[%c0_39, %c8] : memref<32x96xf32, #tpu.memory_space<vmem>>, vector<9x8xf32>
    %c0_40 = arith.constant 0 : index
    %c40 = arith.constant 40 : index
    %63 = vector.load %arg21[%c0_40, %c40] : memref<32x96xf32, #tpu.memory_space<vmem>>, vector<9x8xf32>
    %c0_41 = arith.constant 0 : index
    %c72 = arith.constant 72 : index
    %64 = vector.load %arg21[%c0_41, %c72] : memref<32x96xf32, #tpu.memory_space<vmem>>, vector<9x8xf32>
    %cst_42 = arith.constant dense<0.000000e+00> : vector<9x9xf32>
    %65 = tpu.matmul %62, %63, %cst_42 {dimension_numbers = #tpu.dot_dimension_numbers<[1], [1], [0], [0], [0, 0, 1, 0], [], []>} : vector<9x8xf32>, vector<9x8xf32>, vector<9x9xf32> -> vector<9x9xf32>
    %cst_43 = arith.constant 0.353553385 : f32
    %66 = vector.broadcast %cst_43 : f32 to vector<9x9xf32>
    %67 = arith.mulf %65, %66 : vector<9x9xf32>
    %cst_44 = arith.constant dense<0xFF800000> : vector<9xf32>
    %68 = vector.multi_reduction <maximumf>, %67, %cst_44 [1] : vector<9x9xf32> to vector<9xf32>
    %69 = vector.shape_cast %68 : vector<9xf32> to vector<9x1xf32>
    %70 = vector.broadcast %69 : vector<9x1xf32> to vector<9x9xf32>
    %71 = arith.subf %67, %70 : vector<9x9xf32>
    %72 = math.exp %71 : vector<9x9xf32>
    %cst_45 = arith.constant dense<0.000000e+00> : vector<9xf32>
    %73 = vector.multi_reduction <add>, %72, %cst_45 [1] : vector<9x9xf32> to vector<9xf32>
    %74 = vector.shape_cast %73 : vector<9xf32> to vector<9x1xf32>
    %cst_46 = arith.constant dense<0.000000e+00> : vector<9x8xf32>
    %75 = tpu.matmul %72, %64, %cst_46 {dimension_numbers = #tpu.dot_dimension_numbers<[1], [0], [0], [1], [0, 0, 1, 1], [], []>} : vector<9x9xf32>, vector<9x8xf32>, vector<9x8xf32> -> vector<9x8xf32>
    %76 = tpu.reciprocal %74 {approx = true} : vector<9x1xf32> -> vector<9x1xf32>
    %77 = vector.broadcast %76 : vector<9x1xf32> to vector<9x8xf32>
    %78 = arith.mulf %75, %77 : vector<9x8xf32>
    %c0_47 = arith.constant 0 : index
    %c8_48 = arith.constant 8 : index
    %79 = vector.load %arg22[%c0_47, %c8_48] : memref<32x32xf32, #tpu.memory_space<vmem>>, vector<9x8xf32>
    tpu.vector_store %arg22[%c0_47, %c8_48], %78 {strides = array<i32>} : memref<32x32xf32, #tpu.memory_space<vmem>>, vector<9x8xf32>,
    %c0_49 = arith.constant 0 : index
    %c16 = arith.constant 16 : index
    %80 = vector.load %arg21[%c0_49, %c16] : memref<32x96xf32, #tpu.memory_space<vmem>>, vector<9x8xf32>
    %c0_50 = arith.constant 0 : index
    %c48 = arith.constant 48 : index
    %81 = vector.load %arg21[%c0_50, %c48] : memref<32x96xf32, #tpu.memory_space<vmem>>, vector<9x8xf32>
    %c0_51 = arith.constant 0 : index
    %c80 = arith.constant 80 : index
    %82 = vector.load %arg21[%c0_51, %c80] : memref<32x96xf32, #tpu.memory_space<vmem>>, vector<9x8xf32>
    %cst_52 = arith.constant dense<0.000000e+00> : vector<9x9xf32>
    %83 = tpu.matmul %80, %81, %cst_52 {dimension_numbers = #tpu.dot_dimension_numbers<[1], [1], [0], [0], [0, 0, 1, 0], [], []>} : vector<9x8xf32>, vector<9x8xf32>, vector<9x9xf32> -> vector<9x9xf32>
    %cst_53 = arith.constant 0.353553385 : f32
    %84 = vector.broadcast %cst_53 : f32 to vector<9x9xf32>
    %85 = arith.mulf %83, %84 : vector<9x9xf32>
    %cst_54 = arith.constant dense<0xFF800000> : vector<9xf32>
    %86 = vector.multi_reduction <maximumf>, %85, %cst_54 [1] : vector<9x9xf32> to vector<9xf32>
    %87 = vector.shape_cast %86 : vector<9xf32> to vector<9x1xf32>
    %88 = vector.broadcast %87 : vector<9x1xf32> to vector<9x9xf32>
    %89 = arith.subf %85, %88 : vector<9x9xf32>
    %90 = math.exp %89 : vector<9x9xf32>
    %cst_55 = arith.constant dense<0.000000e+00> : vector<9xf32>
    %91 = vector.multi_reduction <add>, %90, %cst_55 [1] : vector<9x9xf32> to vector<9xf32>
    %92 = vector.shape_cast %91 : vector<9xf32> to vector<9x1xf32>
    %cst_56 = arith.constant dense<0.000000e+00> : vector<9x8xf32>
    %93 = tpu.matmul %90, %82, %cst_56 {dimension_numbers = #tpu.dot_dimension_numbers<[1], [0], [0], [1], [0, 0, 1, 1], [], []>} : vector<9x9xf32>, vector<9x8xf32>, vector<9x8xf32> -> vector<9x8xf32>
    %94 = tpu.reciprocal %92 {approx = true} : vector<9x1xf32> -> vector<9x1xf32>
    %95 = vector.broadcast %94 : vector<9x1xf32> to vector<9x8xf32>
    %96 = arith.mulf %93, %95 : vector<9x8xf32>
    %c0_57 = arith.constant 0 : index
    %c16_58 = arith.constant 16 : index
    %97 = vector.load %arg22[%c0_57, %c16_58] : memref<32x32xf32, #tpu.memory_space<vmem>>, vector<9x8xf32>
    tpu.vector_store %arg22[%c0_57, %c16_58], %96 {strides = array<i32>} : memref<32x32xf32, #tpu.memory_space<vmem>>, vector<9x8xf32>,
    %c0_59 = arith.constant 0 : index
    %c24 = arith.constant 24 : index
    %98 = vector.load %arg21[%c0_59, %c24] : memref<32x96xf32, #tpu.memory_space<vmem>>, vector<9x8xf32>
    %c0_60 = arith.constant 0 : index
    %c56 = arith.constant 56 : index
    %99 = vector.load %arg21[%c0_60, %c56] : memref<32x96xf32, #tpu.memory_space<vmem>>, vector<9x8xf32>
    %c0_61 = arith.constant 0 : index
    %c88 = arith.constant 88 : index
    %100 = vector.load %arg21[%c0_61, %c88] : memref<32x96xf32, #tpu.memory_space<vmem>>, vector<9x8xf32>
    %cst_62 = arith.constant dense<0.000000e+00> : vector<9x9xf32>
    %101 = tpu.matmul %98, %99, %cst_62 {dimension_numbers = #tpu.dot_dimension_numbers<[1], [1], [0], [0], [0, 0, 1, 0], [], []>} : vector<9x8xf32>, vector<9x8xf32>, vector<9x9xf32> -> vector<9x9xf32>
    %cst_63 = arith.constant 0.353553385 : f32
    %102 = vector.broadcast %cst_63 : f32 to vector<9x9xf32>
    %103 = arith.mulf %101, %102 : vector<9x9xf32>
    %cst_64 = arith.constant dense<0xFF800000> : vector<9xf32>
    %104 = vector.multi_reduction <maximumf>, %103, %cst_64 [1] : vector<9x9xf32> to vector<9xf32>
    %105 = vector.shape_cast %104 : vector<9xf32> to vector<9x1xf32>
    %106 = vector.broadcast %105 : vector<9x1xf32> to vector<9x9xf32>
    %107 = arith.subf %103, %106 : vector<9x9xf32>
    %108 = math.exp %107 : vector<9x9xf32>
    %cst_65 = arith.constant dense<0.000000e+00> : vector<9xf32>
    %109 = vector.multi_reduction <add>, %108, %cst_65 [1] : vector<9x9xf32> to vector<9xf32>
    %110 = vector.shape_cast %109 : vector<9xf32> to vector<9x1xf32>
    %cst_66 = arith.constant dense<0.000000e+00> : vector<9x8xf32>
    %111 = tpu.matmul %108, %100, %cst_66 {dimension_numbers = #tpu.dot_dimension_numbers<[1], [0], [0], [1], [0, 0, 1, 1], [], []>} : vector<9x9xf32>, vector<9x8xf32>, vector<9x8xf32> -> vector<9x8xf32>
    %112 = tpu.reciprocal %110 {approx = true} : vector<9x1xf32> -> vector<9x1xf32>
    %113 = vector.broadcast %112 : vector<9x1xf32> to vector<9x8xf32>
    %114 = arith.mulf %111, %113 : vector<9x8xf32>
    %c0_67 = arith.constant 0 : index
    %c24_68 = arith.constant 24 : index
    %115 = vector.load %arg22[%c0_67, %c24_68] : memref<32x32xf32, #tpu.memory_space<vmem>>, vector<9x8xf32>
    tpu.vector_store %arg22[%c0_67, %c24_68], %114 {strides = array<i32>} : memref<32x32xf32, #tpu.memory_space<vmem>>, vector<9x8xf32>,
    %c16_69 = arith.constant 16 : index
    %c0_70 = arith.constant 0 : index
    %116 = vector.load %arg21[%c16_69, %c0_70] : memref<32x96xf32, #tpu.memory_space<vmem>>, vector<9x8xf32>
    %c16_71 = arith.constant 16 : index
    %c32_72 = arith.constant 32 : index
    %117 = vector.load %arg21[%c16_71, %c32_72] : memref<32x96xf32, #tpu.memory_space<vmem>>, vector<9x8xf32>
    %c16_73 = arith.constant 16 : index
    %c64_74 = arith.constant 64 : index
    %118 = vector.load %arg21[%c16_73, %c64_74] : memref<32x96xf32, #tpu.memory_space<vmem>>, vector<9x8xf32>
    %cst_75 = arith.constant dense<0.000000e+00> : vector<9x9xf32>
    %119 = tpu.matmul %116, %117, %cst_75 {dimension_numbers = #tpu.dot_dimension_numbers<[1], [1], [0], [0], [0, 0, 1, 0], [], []>} : vector<9x8xf32>, vector<9x8xf32>, vector<9x9xf32> -> vector<9x9xf32>
    %cst_76 = arith.constant 0.353553385 : f32
    %120 = vector.broadcast %cst_76 : f32 to vector<9x9xf32>
    %121 = arith.mulf %119, %120 : vector<9x9xf32>
    %cst_77 = arith.constant dense<0xFF800000> : vector<9xf32>
    %122 = vector.multi_reduction <maximumf>, %121, %cst_77 [1] : vector<9x9xf32> to vector<9xf32>
    %123 = vector.shape_cast %122 : vector<9xf32> to vector<9x1xf32>
    %124 = vector.broadcast %123 : vector<9x1xf32> to vector<9x9xf32>
    %125 = arith.subf %121, %124 : vector<9x9xf32>
    %126 = math.exp %125 : vector<9x9xf32>
    %cst_78 = arith.constant dense<0.000000e+00> : vector<9xf32>
    %127 = vector.multi_reduction <add>, %126, %cst_78 [1] : vector<9x9xf32> to vector<9xf32>
    %128 = vector.shape_cast %127 : vector<9xf32> to vector<9x1xf32>
    %cst_79 = arith.constant dense<0.000000e+00> : vector<9x8xf32>
    %129 = tpu.matmul %126, %118, %cst_79 {dimension_numbers = #tpu.dot_dimension_numbers<[1], [0], [0], [1], [0, 0, 1, 1], [], []>} : vector<9x9xf32>, vector<9x8xf32>, vector<9x8xf32> -> vector<9x8xf32>
    %130 = tpu.reciprocal %128 {approx = true} : vector<9x1xf32> -> vector<9x1xf32>
    %131 = vector.broadcast %130 : vector<9x1xf32> to vector<9x8xf32>
    %132 = arith.mulf %129, %131 : vector<9x8xf32>
    %c16_80 = arith.constant 16 : index
    %c0_81 = arith.constant 0 : index
    %133 = vector.load %arg22[%c16_80, %c0_81] : memref<32x32xf32, #tpu.memory_space<vmem>>, vector<9x8xf32>
    tpu.vector_store %arg22[%c16_80, %c0_81], %132 {strides = array<i32>} : memref<32x32xf32, #tpu.memory_space<vmem>>, vector<9x8xf32>,
    %c16_82 = arith.constant 16 : index
    %c8_83 = arith.constant 8 : index
    %134 = vector.load %arg21[%c16_82, %c8_83] : memref<32x96xf32, #tpu.memory_space<vmem>>, vector<9x8xf32>
    %c16_84 = arith.constant 16 : index
    %c40_85 = arith.constant 40 : index
    %135 = vector.load %arg21[%c16_84, %c40_85] : memref<32x96xf32, #tpu.memory_space<vmem>>, vector<9x8xf32>
    %c16_86 = arith.constant 16 : index
    %c72_87 = arith.constant 72 : index
    %136 = vector.load %arg21[%c16_86, %c72_87] : memref<32x96xf32, #tpu.memory_space<vmem>>, vector<9x8xf32>
    %cst_88 = arith.constant dense<0.000000e+00> : vector<9x9xf32>
    %137 = tpu.matmul %134, %135, %cst_88 {dimension_numbers = #tpu.dot_dimension_numbers<[1], [1], [0], [0], [0, 0, 1, 0], [], []>} : vector<9x8xf32>, vector<9x8xf32>, vector<9x9xf32> -> vector<9x9xf32>
    %cst_89 = arith.constant 0.353553385 : f32
    %138 = vector.broadcast %cst_89 : f32 to vector<9x9xf32>
    %139 = arith.mulf %137, %138 : vector<9x9xf32>
    %cst_90 = arith.constant dense<0xFF800000> : vector<9xf32>
    %140 = vector.multi_reduction <maximumf>, %139, %cst_90 [1] : vector<9x9xf32> to vector<9xf32>
    %141 = vector.shape_cast %140 : vector<9xf32> to vector<9x1xf32>
    %142 = vector.broadcast %141 : vector<9x1xf32> to vector<9x9xf32>
    %143 = arith.subf %139, %142 : vector<9x9xf32>
    %144 = math.exp %143 : vector<9x9xf32>
    %cst_91 = arith.constant dense<0.000000e+00> : vector<9xf32>
    %145 = vector.multi_reduction <add>, %144, %cst_91 [1] : vector<9x9xf32> to vector<9xf32>
    %146 = vector.shape_cast %145 : vector<9xf32> to vector<9x1xf32>
    %cst_92 = arith.constant dense<0.000000e+00> : vector<9x8xf32>
    %147 = tpu.matmul %144, %136, %cst_92 {dimension_numbers = #tpu.dot_dimension_numbers<[1], [0], [0], [1], [0, 0, 1, 1], [], []>} : vector<9x9xf32>, vector<9x8xf32>, vector<9x8xf32> -> vector<9x8xf32>
    %148 = tpu.reciprocal %146 {approx = true} : vector<9x1xf32> -> vector<9x1xf32>
    %149 = vector.broadcast %148 : vector<9x1xf32> to vector<9x8xf32>
    %150 = arith.mulf %147, %149 : vector<9x8xf32>
    %c16_93 = arith.constant 16 : index
    %c8_94 = arith.constant 8 : index
    %151 = vector.load %arg22[%c16_93, %c8_94] : memref<32x32xf32, #tpu.memory_space<vmem>>, vector<9x8xf32>
    tpu.vector_store %arg22[%c16_93, %c8_94], %150 {strides = array<i32>} : memref<32x32xf32, #tpu.memory_space<vmem>>, vector<9x8xf32>,
    %c16_95 = arith.constant 16 : index
    %c16_96 = arith.constant 16 : index
    %152 = vector.load %arg21[%c16_95, %c16_96] : memref<32x96xf32, #tpu.memory_space<vmem>>, vector<9x8xf32>
    %c16_97 = arith.constant 16 : index
    %c48_98 = arith.constant 48 : index
    %153 = vector.load %arg21[%c16_97, %c48_98] : memref<32x96xf32, #tpu.memory_space<vmem>>, vector<9x8xf32>
    %c16_99 = arith.constant 16 : index
    %c80_100 = arith.constant 80 : index
    %154 = vector.load %arg21[%c16_99, %c80_100] : memref<32x96xf32, #tpu.memory_space<vmem>>, vector<9x8xf32>
    %cst_101 = arith.constant dense<0.000000e+00> : vector<9x9xf32>
    %155 = tpu.matmul %152, %153, %cst_101 {dimension_numbers = #tpu.dot_dimension_numbers<[1], [1], [0], [0], [0, 0, 1, 0], [], []>} : vector<9x8xf32>, vector<9x8xf32>, vector<9x9xf32> -> vector<9x9xf32>
    %cst_102 = arith.constant 0.353553385 : f32
    %156 = vector.broadcast %cst_102 : f32 to vector<9x9xf32>
    %157 = arith.mulf %155, %156 : vector<9x9xf32>
    %cst_103 = arith.constant dense<0xFF800000> : vector<9xf32>
    %158 = vector.multi_reduction <maximumf>, %157, %cst_103 [1] : vector<9x9xf32> to vector<9xf32>
    %159 = vector.shape_cast %158 : vector<9xf32> to vector<9x1xf32>
    %160 = vector.broadcast %159 : vector<9x1xf32> to vector<9x9xf32>
    %161 = arith.subf %157, %160 : vector<9x9xf32>
    %162 = math.exp %161 : vector<9x9xf32>
    %cst_104 = arith.constant dense<0.000000e+00> : vector<9xf32>
    %163 = vector.multi_reduction <add>, %162, %cst_104 [1] : vector<9x9xf32> to vector<9xf32>
    %164 = vector.shape_cast %163 : vector<9xf32> to vector<9x1xf32>
    %cst_105 = arith.constant dense<0.000000e+00> : vector<9x8xf32>
    %165 = tpu.matmul %162, %154, %cst_105 {dimension_numbers = #tpu.dot_dimension_numbers<[1], [0], [0], [1], [0, 0, 1, 1], [], []>} : vector<9x9xf32>, vector<9x8xf32>, vector<9x8xf32> -> vector<9x8xf32>
    %166 = tpu.reciprocal %164 {approx = true} : vector<9x1xf32> -> vector<9x1xf32>
    %167 = vector.broadcast %166 : vector<9x1xf32> to vector<9x8xf32>
    %168 = arith.mulf %165, %167 : vector<9x8xf32>
    %c16_106 = arith.constant 16 : index
    %c16_107 = arith.constant 16 : index
    %169 = vector.load %arg22[%c16_106, %c16_107] : memref<32x32xf32, #tpu.memory_space<vmem>>, vector<9x8xf32>
    tpu.vector_store %arg22[%c16_106, %c16_107], %168 {strides = array<i32>} : memref<32x32xf32, #tpu.memory_space<vmem>>, vector<9x8xf32>,
    %c16_108 = arith.constant 16 : index
    %c24_109 = arith.constant 24 : index
    %170 = vector.load %arg21[%c16_108, %c24_109] : memref<32x96xf32, #tpu.memory_space<vmem>>, vector<9x8xf32>
    %c16_110 = arith.constant 16 : index
    %c56_111 = arith.constant 56 : index
    %171 = vector.load %arg21[%c16_110, %c56_111] : memref<32x96xf32, #tpu.memory_space<vmem>>, vector<9x8xf32>
    %c16_112 = arith.constant 16 : index
    %c88_113 = arith.constant 88 : index
    %172 = vector.load %arg21[%c16_112, %c88_113] : memref<32x96xf32, #tpu.memory_space<vmem>>, vector<9x8xf32>
    %cst_114 = arith.constant dense<0.000000e+00> : vector<9x9xf32>
    %173 = tpu.matmul %170, %171, %cst_114 {dimension_numbers = #tpu.dot_dimension_numbers<[1], [1], [0], [0], [0, 0, 1, 0], [], []>} : vector<9x8xf32>, vector<9x8xf32>, vector<9x9xf32> -> vector<9x9xf32>
    %cst_115 = arith.constant 0.353553385 : f32
    %174 = vector.broadcast %cst_115 : f32 to vector<9x9xf32>
    %175 = arith.mulf %173, %174 : vector<9x9xf32>
    %cst_116 = arith.constant dense<0xFF800000> : vector<9xf32>
    %176 = vector.multi_reduction <maximumf>, %175, %cst_116 [1] : vector<9x9xf32> to vector<9xf32>
    %177 = vector.shape_cast %176 : vector<9xf32> to vector<9x1xf32>
    %178 = vector.broadcast %177 : vector<9x1xf32> to vector<9x9xf32>
    %179 = arith.subf %175, %178 : vector<9x9xf32>
    %180 = math.exp %179 : vector<9x9xf32>
    %cst_117 = arith.constant dense<0.000000e+00> : vector<9xf32>
    %181 = vector.multi_reduction <add>, %180, %cst_117 [1] : vector<9x9xf32> to vector<9xf32>
    %182 = vector.shape_cast %181 : vector<9xf32> to vector<9x1xf32>
    %cst_118 = arith.constant dense<0.000000e+00> : vector<9x8xf32>
    %183 = tpu.matmul %180, %172, %cst_118 {dimension_numbers = #tpu.dot_dimension_numbers<[1], [0], [0], [1], [0, 0, 1, 1], [], []>} : vector<9x9xf32>, vector<9x8xf32>, vector<9x8xf32> -> vector<9x8xf32>
    %184 = tpu.reciprocal %182 {approx = true} : vector<9x1xf32> -> vector<9x1xf32>
    %185 = vector.broadcast %184 : vector<9x1xf32> to vector<9x8xf32>
    %186 = arith.mulf %183, %185 : vector<9x8xf32>
    %c16_119 = arith.constant 16 : index
    %c24_120 = arith.constant 24 : index
    %187 = vector.load %arg22[%c16_119, %c24_120] : memref<32x32xf32, #tpu.memory_space<vmem>>, vector<9x8xf32>
    tpu.vector_store %arg22[%c16_119, %c24_120], %186 {strides = array<i32>} : memref<32x32xf32, #tpu.memory_space<vmem>>, vector<9x8xf32>,
    %c0_121 = arith.constant 0 : index
    %c0_122 = arith.constant 0 : index
    %188 = vector.load %arg22[%c0_121, %c0_122] : memref<32x32xf32, #tpu.memory_space<vmem>>, vector<32x32xf32>
    %c0_123 = arith.constant 0 : index
    %c0_124 = arith.constant 0 : index
    %c0_125 = arith.constant 0 : index
    %189 = vector.load %arg7[%c0_123, %c0_124, %c0_125] : memref<1x32x32xf32, #tpu.memory_space<vmem>>, vector<1x32x32xf32>
    %190 = vector.shape_cast %189 : vector<1x32x32xf32> to vector<32x32xf32>
    %cst_126 = arith.constant dense<0.000000e+00> : vector<32x32xf32>
    %191 = tpu.matmul %188, %190, %cst_126 {dimension_numbers = #tpu.dot_dimension_numbers<[1], [0], [0], [1], [0, 0, 1, 1], [], []>} : vector<32x32xf32>, vector<32x32xf32>, vector<32x32xf32> -> vector<32x32xf32>
    %192 = arith.addf %3, %191 : vector<32x32xf32>
    %c0_127 = arith.constant 0 : index
    %c0_128 = arith.constant 0 : index
    %c0_129 = arith.constant 0 : index
    %193 = vector.load %arg8[%c0_127, %c0_128, %c0_129] : memref<1x1x32xf32, #tpu.memory_space<vmem>>, vector<1x1x32xf32>
    %194 = vector.shape_cast %193 : vector<1x1x32xf32> to vector<1x32xf32>
    %195 = vector.broadcast %194 : vector<1x32xf32> to vector<32x32xf32>
    %196 = arith.addf %192, %195 : vector<32x32xf32>
    %cst_130 = arith.constant dense<0.000000e+00> : vector<32xf32>
    %197 = vector.multi_reduction <add>, %196, %cst_130 [1] : vector<32x32xf32> to vector<32xf32>
    %198 = vector.shape_cast %197 : vector<32xf32> to vector<32x1xf32>
    %cst_131 = arith.constant 3.200000e+01 : f32
    %199 = vector.broadcast %cst_131 : f32 to vector<32x1xf32>
    %200 = arith.divf %198, %199 : vector<32x1xf32>
    %201 = vector.broadcast %200 : vector<32x1xf32> to vector<32x32xf32>
    %202 = arith.subf %196, %201 : vector<32x32xf32>
    %203 = arith.mulf %202, %202 : vector<32x32xf32>
    %cst_132 = arith.constant dense<0.000000e+00> : vector<32xf32>
    %204 = vector.multi_reduction <add>, %203, %cst_132 [1] : vector<32x32xf32> to vector<32xf32>
    %205 = vector.shape_cast %204 : vector<32xf32> to vector<32x1xf32>
    %cst_133 = arith.constant 3.200000e+01 : f32
    %206 = vector.broadcast %cst_133 : f32 to vector<32x1xf32>
    %207 = arith.divf %205, %206 : vector<32x1xf32>
    %208 = vector.broadcast %200 : vector<32x1xf32> to vector<32x32xf32>
    %209 = arith.subf %196, %208 : vector<32x32xf32>
    %cst_134 = arith.constant 9.99999974E-6 : f32
    %210 = vector.broadcast %cst_134 : f32 to vector<32x1xf32>
    %211 = arith.addf %207, %210 : vector<32x1xf32>
    %212 = math.rsqrt %211 : vector<32x1xf32>
    %213 = vector.broadcast %212 : vector<32x1xf32> to vector<32x32xf32>
    %214 = arith.mulf %209, %213 : vector<32x32xf32>
    %215 = vector.broadcast %9 : vector<1x32xf32> to vector<32x32xf32>
    %216 = arith.mulf %214, %215 : vector<32x32xf32>
    %217 = vector.broadcast %11 : vector<1x32xf32> to vector<32x32xf32>
    %218 = arith.addf %216, %217 : vector<32x32xf32>
    %c0_135 = arith.constant 0 : index
    %c0_136 = arith.constant 0 : index
    %c0_137 = arith.constant 0 : index
    %219 = vector.load %arg11[%c0_135, %c0_136, %c0_137] : memref<1x32x64xf32, #tpu.memory_space<vmem>>, vector<1x32x64xf32>
    %220 = vector.shape_cast %219 : vector<1x32x64xf32> to vector<32x64xf32>
    %cst_138 = arith.constant dense<0.000000e+00> : vector<32x64xf32>
    %221 = tpu.matmul %218, %220, %cst_138 {dimension_numbers = #tpu.dot_dimension_numbers<[1], [0], [0], [1], [0, 0, 1, 1], [], []>} : vector<32x32xf32>, vector<32x64xf32>, vector<32x64xf32> -> vector<32x64xf32>
    %c0_139 = arith.constant 0 : index
    %c0_140 = arith.constant 0 : index
    %c0_141 = arith.constant 0 : index
    %222 = vector.load %arg12[%c0_139, %c0_140, %c0_141] : memref<1x1x64xf32, #tpu.memory_space<vmem>>, vector<1x1x64xf32>
    %223 = vector.shape_cast %222 : vector<1x1x64xf32> to vector<1x64xf32>
    %224 = vector.broadcast %223 : vector<1x64xf32> to vector<32x64xf32>
    %225 = arith.addf %221, %224 : vector<32x64xf32>
    %cst_142 = arith.constant 0.000000e+00 : f32
    %226 = vector.broadcast %cst_142 : f32 to vector<32x64xf32>
    %227 = arith.maximumf %225, %226 : vector<32x64xf32>
    %c0_143 = arith.constant 0 : index
    %c0_144 = arith.constant 0 : index
    %c0_145 = arith.constant 0 : index
    %228 = vector.load %arg13[%c0_143, %c0_144, %c0_145] : memref<1x64x32xf32, #tpu.memory_space<vmem>>, vector<1x64x32xf32>
    %229 = vector.shape_cast %228 : vector<1x64x32xf32> to vector<64x32xf32>
    %cst_146 = arith.constant dense<0.000000e+00> : vector<32x32xf32>
    %230 = tpu.matmul %227, %229, %cst_146 {dimension_numbers = #tpu.dot_dimension_numbers<[1], [0], [0], [1], [0, 0, 1, 1], [], []>} : vector<32x64xf32>, vector<64x32xf32>, vector<32x32xf32> -> vector<32x32xf32>
    %231 = arith.addf %196, %230 : vector<32x32xf32>
    %c0_147 = arith.constant 0 : index
    %c0_148 = arith.constant 0 : index
    %c0_149 = arith.constant 0 : index
    %232 = vector.load %arg14[%c0_147, %c0_148, %c0_149] : memref<1x1x32xf32, #tpu.memory_space<vmem>>, vector<1x1x32xf32>
    %233 = vector.shape_cast %232 : vector<1x1x32xf32> to vector<1x32xf32>
    %234 = vector.broadcast %233 : vector<1x32xf32> to vector<32x32xf32>
    %235 = arith.addf %231, %234 : vector<32x32xf32>
    %c0_150 = arith.constant 0 : index
    %c0_151 = arith.constant 0 : index
    %236 = vector.load %arg20[%c0_150, %c0_151] : memref<32x32xf32, #tpu.memory_space<vmem>>, vector<32x32xf32>
    tpu.vector_store %arg20[%c0_150, %c0_151], %235 {strides = array<i32>} : memref<32x32xf32, #tpu.memory_space<vmem>>, vector<32x32xf32>,
    %c1_i32 = arith.constant 1 : i32
    %237 = arith.cmpi eq, %arg1, %c1_i32 : i32
    %238 = arith.extui %237 : i1 to i32
    %c0_i32_152 = arith.constant 0 : i32
    %239 = arith.cmpi ne, %238, %c0_i32_152 : i32
    scf.if %239 {
      %240 = vector.extract_strided_slice %235 {offsets = [0, 0], sizes = [1, 32], strides = [1, 1]} : vector<32x32xf32> to vector<1x32xf32>
      %241 = vector.extract_strided_slice %235 {offsets = [16, 0], sizes = [1, 32], strides = [1, 1]} : vector<32x32xf32> to vector<1x32xf32>
      %242 = tpu.concatenate %240, %241 in 0 : vector<1x32xf32>, vector<1x32xf32> -> vector<2x32xf32>
      %c0_153 = arith.constant 0 : index
      %c0_154 = arith.constant 0 : index
      %243 = vector.load %arg15[%c0_153, %c0_154] : memref<1x32xf32, #tpu.memory_space<vmem>>, vector<1x32xf32>
      %c0_155 = arith.constant 0 : index
      %c0_156 = arith.constant 0 : index
      %244 = vector.load %arg16[%c0_155, %c0_156] : memref<1x32xf32, #tpu.memory_space<vmem>>, vector<1x32xf32>
      %cst_157 = arith.constant dense<0.000000e+00> : vector<2xf32>
      %245 = vector.multi_reduction <add>, %242, %cst_157 [1] : vector<2x32xf32> to vector<2xf32>
      %246 = vector.shape_cast %245 : vector<2xf32> to vector<2x1xf32>
      %cst_158 = arith.constant 3.200000e+01 : f32
      %247 = vector.broadcast %cst_158 : f32 to vector<2x1xf32>
      %248 = arith.divf %246, %247 : vector<2x1xf32>
      %249 = vector.broadcast %248 : vector<2x1xf32> to vector<2x32xf32>
      %250 = arith.subf %242, %249 : vector<2x32xf32>
      %251 = arith.mulf %250, %250 : vector<2x32xf32>
      %cst_159 = arith.constant dense<0.000000e+00> : vector<2xf32>
      %252 = vector.multi_reduction <add>, %251, %cst_159 [1] : vector<2x32xf32> to vector<2xf32>
      %253 = vector.shape_cast %252 : vector<2xf32> to vector<2x1xf32>
      %cst_160 = arith.constant 3.200000e+01 : f32
      %254 = vector.broadcast %cst_160 : f32 to vector<2x1xf32>
      %255 = arith.divf %253, %254 : vector<2x1xf32>
      %256 = vector.broadcast %248 : vector<2x1xf32> to vector<2x32xf32>
      %257 = arith.subf %242, %256 : vector<2x32xf32>
      %cst_161 = arith.constant 9.99999974E-6 : f32
      %258 = vector.broadcast %cst_161 : f32 to vector<2x1xf32>
      %259 = arith.addf %255, %258 : vector<2x1xf32>
      %260 = math.rsqrt %259 : vector<2x1xf32>
      %261 = vector.broadcast %260 : vector<2x1xf32> to vector<2x32xf32>
      %262 = arith.mulf %257, %261 : vector<2x32xf32>
      %263 = vector.broadcast %243 : vector<1x32xf32> to vector<2x32xf32>
      %264 = arith.mulf %262, %263 : vector<2x32xf32>
      %265 = vector.broadcast %244 : vector<1x32xf32> to vector<2x32xf32>
      %266 = arith.addf %264, %265 : vector<2x32xf32>
      %cst_162 = arith.constant 0.000000e+00 : f32
      %267 = vector.broadcast %cst_162 : f32 to vector<2x32xf32>
      %268 = arith.maximumf %266, %267 : vector<2x32xf32>
      %c0_163 = arith.constant 0 : index
      %c0_164 = arith.constant 0 : index
      %269 = vector.load %arg17[%c0_163, %c0_164] : memref<32x16xf32, #tpu.memory_space<vmem>>, vector<32x16xf32>
      %cst_165 = arith.constant dense<0.000000e+00> : vector<2x16xf32>
      %270 = tpu.matmul %268, %269, %cst_165 {dimension_numbers = #tpu.dot_dimension_numbers<[1], [0], [0], [1], [0, 0, 1, 1], [], []>} : vector<2x32xf32>, vector<32x16xf32>, vector<2x16xf32> -> vector<2x16xf32>
      %c0_166 = arith.constant 0 : index
      %c0_167 = arith.constant 0 : index
      %271 = vector.load %arg18[%c0_166, %c0_167] : memref<1x16xf32, #tpu.memory_space<vmem>>, vector<1x16xf32>
      %272 = vector.broadcast %271 : vector<1x16xf32> to vector<2x16xf32>
      %273 = arith.addf %270, %272 : vector<2x16xf32>
      %c0_168 = arith.constant 0 : index
      %c0_169 = arith.constant 0 : index
      %c0_170 = arith.constant 0 : index
      %274 = vector.load %arg19[%c0_168, %c0_169, %c0_170] : memref<1x2x16xf32, #tpu.memory_space<vmem>>, vector<1x2x16xf32>
      %275 = vector.shape_cast %274 : vector<1x2x16xf32> to vector<2x16xf32>
      %276 = vector.shape_cast %273 : vector<2x16xf32> to vector<1x2x16xf32>
      tpu.vector_store %arg19[%c0_168, %c0_169, %c0_170], %276 {strides = array<i32>} : memref<1x2x16xf32, #tpu.memory_space<vmem>>, vector<1x2x16xf32>,
    } else {
    }
    return
  }
  func.func @transform_0(%arg0: i32, %arg1: i32) -> (i32, i32, i32) {
    %c0_i32 = arith.constant 0 : i32
    %c0_i32_0 = arith.constant 0 : i32
    %c0_i32_1 = arith.constant 0 : i32
    return %arg0, %c0_i32, %c0_i32_0 : i32, i32, i32
  }
  func.func @transform_1(%arg0: i32, %arg1: i32) -> (i32, i32, i32) {
    %c0_i32 = arith.constant 0 : i32
    %c0_i32_0 = arith.constant 0 : i32
    %c0_i32_1 = arith.constant 0 : i32
    return %arg1, %c0_i32, %c0_i32_0 : i32, i32, i32
  }
  func.func @transform_2(%arg0: i32, %arg1: i32) -> (i32, i32, i32) {
    %c0_i32 = arith.constant 0 : i32
    %c0_i32_0 = arith.constant 0 : i32
    %c0_i32_1 = arith.constant 0 : i32
    return %arg1, %c0_i32, %c0_i32_0 : i32, i32, i32
  }
  func.func @transform_3(%arg0: i32, %arg1: i32) -> (i32, i32, i32) {
    %c0_i32 = arith.constant 0 : i32
    %c0_i32_0 = arith.constant 0 : i32
    %c0_i32_1 = arith.constant 0 : i32
    return %arg1, %c0_i32, %c0_i32_0 : i32, i32, i32
  }
  func.func @transform_4(%arg0: i32, %arg1: i32) -> (i32, i32, i32) {
    %c0_i32 = arith.constant 0 : i32
    %c0_i32_0 = arith.constant 0 : i32
    %c0_i32_1 = arith.constant 0 : i32
    return %arg1, %c0_i32, %c0_i32_0 : i32, i32, i32
  }
  func.func @transform_5(%arg0: i32, %arg1: i32) -> (i32, i32, i32) {
    %c0_i32 = arith.constant 0 : i32
    %c0_i32_0 = arith.constant 0 : i32
    %c0_i32_1 = arith.constant 0 : i32
    return %arg1, %c0_i32, %c0_i32_0 : i32, i32, i32
  }
  func.func @transform_6(%arg0: i32, %arg1: i32) -> (i32, i32, i32) {
    %c0_i32 = arith.constant 0 : i32
    %c0_i32_0 = arith.constant 0 : i32
    %c0_i32_1 = arith.constant 0 : i32
    return %arg1, %c0_i32, %c0_i32_0 : i32, i32, i32
  }
  func.func @transform_7(%arg0: i32, %arg1: i32) -> (i32, i32, i32) {
    %c0_i32 = arith.constant 0 : i32
    %c0_i32_0 = arith.constant 0 : i32
    %c0_i32_1 = arith.constant 0 : i32
    return %arg1, %c0_i32, %c0_i32_0 : i32, i32, i32
  }
  func.func @transform_8(%arg0: i32, %arg1: i32) -> (i32, i32, i32) {
    %c0_i32 = arith.constant 0 : i32
    %c0_i32_0 = arith.constant 0 : i32
    %c0_i32_1 = arith.constant 0 : i32
    return %arg1, %c0_i32, %c0_i32_0 : i32, i32, i32
  }
  func.func @transform_9(%arg0: i32, %arg1: i32) -> (i32, i32, i32) {
    %c0_i32 = arith.constant 0 : i32
    %c0_i32_0 = arith.constant 0 : i32
    %c0_i32_1 = arith.constant 0 : i32
    return %arg1, %c0_i32, %c0_i32_0 : i32, i32, i32
  }
  func.func @transform_10(%arg0: i32, %arg1: i32) -> (i32, i32, i32) {
    %c0_i32 = arith.constant 0 : i32
    %c0_i32_0 = arith.constant 0 : i32
    %c0_i32_1 = arith.constant 0 : i32
    return %arg1, %c0_i32, %c0_i32_0 : i32, i32, i32
  }
  func.func @transform_11(%arg0: i32, %arg1: i32) -> (i32, i32, i32) {
    %c0_i32 = arith.constant 0 : i32
    %c0_i32_0 = arith.constant 0 : i32
    %c0_i32_1 = arith.constant 0 : i32
    return %arg1, %c0_i32, %c0_i32_0 : i32, i32, i32
  }
  func.func @transform_12(%arg0: i32, %arg1: i32) -> (i32, i32, i32) {
    %c0_i32 = arith.constant 0 : i32
    %c0_i32_0 = arith.constant 0 : i32
    %c0_i32_1 = arith.constant 0 : i32
    return %arg1, %c0_i32, %c0_i32_0 : i32, i32, i32
  }
  func.func @transform_13(%arg0: i32, %arg1: i32) -> (i32, i32) {
    %c0_i32 = arith.constant 0 : i32
    %c0_i32_0 = arith.constant 0 : i32
    %c0_i32_1 = arith.constant 0 : i32
    return %c0_i32, %c0_i32_0 : i32, i32
  }
  func.func @transform_14(%arg0: i32, %arg1: i32) -> (i32, i32) {
    %c0_i32 = arith.constant 0 : i32
    %c0_i32_0 = arith.constant 0 : i32
    %c0_i32_1 = arith.constant 0 : i32
    return %c0_i32, %c0_i32_0 : i32, i32
  }
  func.func @transform_15(%arg0: i32, %arg1: i32) -> (i32, i32) {
    %c0_i32 = arith.constant 0 : i32
    %c0_i32_0 = arith.constant 0 : i32
    %c0_i32_1 = arith.constant 0 : i32
    return %c0_i32, %c0_i32_0 : i32, i32
  }
  func.func @transform_16(%arg0: i32, %arg1: i32) -> (i32, i32) {
    %c0_i32 = arith.constant 0 : i32
    %c0_i32_0 = arith.constant 0 : i32
    %c0_i32_1 = arith.constant 0 : i32
    return %c0_i32, %c0_i32_0 : i32, i32
  }
  func.func @transform_17(%arg0: i32, %arg1: i32) -> (i32, i32, i32) {
    %c0_i32 = arith.constant 0 : i32
    %c0_i32_0 = arith.constant 0 : i32
    %c0_i32_1 = arith.constant 0 : i32
    return %arg0, %c0_i32, %c0_i32_0 : i32, i32, i32
  }
}

</mosaic_0001>

<llo_original>
// kernel: _lambda_.1
$region0: #{_lambda_.1}
  #allocation0 [shape = 'u32[]', space=smem, size = 0x4, offset = 0x4, fixed_abs, tag = 'smem constant byte address 0x4 - core index']
  #allocation1 [shape = 'u32[72,128]{1,0:T(1,128)}', space=vmem, size = 0x9000, scoped, tag = 'internal scratch']
  #allocation2 [shape = 'f32[32,32]{1,0:T(8,128)}', space=vmem, size = 0x4000, scoped, tag = 'scratch operand']
  #allocation3 [shape = 'f32[32,96]{1,0:T(8,128)}', space=vmem, size = 0x4000, scoped, tag = 'scratch operand']
  #allocation4 [shape = 'f32[32,32]{1,0:T(8,128)}', space=vmem, size = 0x4000, scoped, tag = 'scratch operand']
  %s0 = inlined_call_operand.vmem [shape: f32[2,9,32], index: 0, kind: input, shape index: {}]
  %s1 = inlined_call_operand.vmem [shape: f32[2,1,32], index: 1, kind: input, shape index: {}]
  %s2 = inlined_call_operand.vmem [shape: f32[2,1,32], index: 2, kind: input, shape index: {}]
  %s3 = inlined_call_operand.vmem [shape: f32[2,32,96], index: 3, kind: input, shape index: {}]
  %s4 = inlined_call_operand.vmem [shape: f32[2,1,96], index: 4, kind: input, shape index: {}]
  %s5 = inlined_call_operand.vmem [shape: f32[2,32,32], index: 5, kind: input, shape index: {}]
  %s6 = inlined_call_operand.vmem [shape: f32[2,1,32], index: 6, kind: input, shape index: {}]
  %s7 = inlined_call_operand.vmem [shape: f32[2,1,32], index: 7, kind: input, shape index: {}]
  %s8 = inlined_call_operand.vmem [shape: f32[2,1,32], index: 8, kind: input, shape index: {}]
  %s9 = inlined_call_operand.vmem [shape: f32[2,32,64], index: 9, kind: input, shape index: {}]
  %s10 = inlined_call_operand.vmem [shape: f32[2,1,64], index: 10, kind: input, shape index: {}]
  %s11 = inlined_call_operand.vmem [shape: f32[2,64,32], index: 11, kind: input, shape index: {}]
  %s12 = inlined_call_operand.vmem [shape: f32[2,1,32], index: 12, kind: input, shape index: {}]
  %s13 = inlined_call_operand.vmem [shape: f32[1,32], index: 13, kind: input, shape index: {}]
  %s14 = inlined_call_operand.vmem [shape: f32[1,32], index: 14, kind: input, shape index: {}]
  %s15 = inlined_call_operand.vmem [shape: f32[32,16], index: 15, kind: input, shape index: {}]
  %s16 = inlined_call_operand.vmem [shape: f32[1,16], index: 16, kind: input, shape index: {}]
  %s17 = inlined_call_operand.hbm [shape: f32[1,2,16], index: 17, kind: output, shape index: {}]
  %s18 = sld [smem:[#allocation0]]
  $region109: #{_lambda_.1} parent=0
    _
  %s20 = ssub.s32 1, %s18
  %s21 = scalar_select 0, %s20, %s18
  $region1: #{_lambda_.1} parent=0
    #allocation5 [shape = 'u8[1024]{0}', space=vmem, size = 0x400, scoped, tag = 'output window, operand 0, single buffered']
    #allocation6 [shape = 's32[2]{0}', space=sflag, size = 0x8, scoped, tag = 'scoped memory for _lambda_.1']
    %22 = vsyncpa [#allocation6], 0
    loop: start=0, step=1, limit=4
    $region2: #{_lambda_.1} parent=1 // loop_pre_header
      _
    $region3: #{_lambda_.1} parent=1 // loop_header
      %s24 = sphi 0, %s28
      %p25 = scmp.ge.s32.totalorder %s24, 4
      %s31 = sphi 0, %s43
      %s32 = sphi 0, %s39
      %s33 = sphi 0, %s31
      %s34 = sphi 0, %s32
      %s35 = sphi 0, %s33
      %s36 = sphi 0, %s34
      %s46 = sphi 0, %s48
      %s49 = sphi 0, %s46
      %s50 = sphi 0, %s49
      %s66 = sphi 0, %s50
      %s72 = sphi 0, %s74
      %s75 = sphi 0, %s72
      %s76 = sphi 0, %s75
      %s92 = sphi 0, %s76
      %s98 = sphi 0, %s100
      %s101 = sphi 0, %s98
      %s102 = sphi 0, %s101
      %s118 = sphi 0, %s102
      %s124 = sphi 0, %s126
      %s127 = sphi 0, %s124
      %s128 = sphi 0, %s127
      %s144 = sphi 0, %s128
      %s150 = sphi 0, %s152
      %s153 = sphi 0, %s150
      %s154 = sphi 0, %s153
      %s170 = sphi 0, %s154
      %s176 = sphi 0, %s178
      %s179 = sphi 0, %s176
      %s180 = sphi 0, %s179
      %s196 = sphi 0, %s180
      %s202 = sphi 0, %s204
      %s205 = sphi 0, %s202
      %s206 = sphi 0, %s205
      %s222 = sphi 0, %s206
      %s228 = sphi 0, %s230
      %s231 = sphi 0, %s228
      %s232 = sphi 0, %s231
      %s248 = sphi 0, %s232
      %s254 = sphi 0, %s256
      %s257 = sphi 0, %s254
      %s258 = sphi 0, %s257
      %s274 = sphi 0, %s258
      %s280 = sphi 0, %s282
      %s283 = sphi 0, %s280
      %s284 = sphi 0, %s283
      %s300 = sphi 0, %s284
      %s306 = sphi 0, %s308
      %s309 = sphi 0, %s306
      %s310 = sphi 0, %s309
      %s326 = sphi 0, %s310
      %s332 = sphi 0, %s334
      %s335 = sphi 0, %s332
      %s336 = sphi 0, %s335
      %s352 = sphi 0, %s336
      %s358 = sphi 0, %s360
      %s361 = sphi 0, %s358
      %s362 = sphi 0, %s361
      %s378 = sphi 0, %s362
      %s382 = sphi 0, %s382
      %s384 = sphi 0, %s382
      %s385 = sphi 0, %s384
      %s399 = sphi 0, %s385
      %s403 = sphi 0, %s403
      %s405 = sphi 0, %s403
      %s406 = sphi 0, %s405
      %s420 = sphi 0, %s406
      %s424 = sphi 0, %s424
      %s426 = sphi 0, %s424
      %s427 = sphi 0, %s426
      %s441 = sphi 0, %s427
      %s445 = sphi 0, %s445
      %s447 = sphi 0, %s445
      %s448 = sphi 0, %s447
      %s462 = sphi 0, %s448
      %s468 = sphi 0, %s470
      %s471 = sphi 0, %s468
      %s472 = sphi 0, %s471
      %s488 = sphi 0, %s472
    $region4: #{_lambda_.1} parent=1 // loop_header_branch
      %27 = sbr.rel (%p25) target = $region8
    $region5: #{_lambda_.1} parent=1 // loop_body
      %s29 = ssub.s32 %s24, 1
      %s30 = ssub.s32 %s24, 2
      %s37 = sadd.s32 1, %s32
      %p38 = scmp.ge.s32.totalorder %s37, 2
      %s39 = scalar_select %p38, 0, %s37
      %s40 = sadd.s32 1, %s31
      %s41 = scalar_select %p38, %s40, %s31
      %p42 = scmp.ge.s32.totalorder %s41, 1
      %s43 = scalar_select %p42, 0, %s41
      %s44 = ssub.s32 %s31, %s43
      %p45 = scmp.eq.s32.totalorder %s44, 0
      %s47 = sadd.s32 %s46, 1
      %s48 = scalar_select %p45, %s46, %s47
      %p51 = pneg %p45
      %p52 = scmp.eq.s32.totalorder %s24, 1
      %p53 = por %p51, %p52
      %p54 = scmp.ne.s32.totalorder %s46, %s49
      %p55 = scmp.eq.s32.totalorder %s24, 0
      %p56 = por %p54, %p55
      %p57 = scmp.ne.s32.totalorder %s46, %s49
      %p58 = scmp.eq.s32.totalorder %s29, 1
      %p59 = por %p57, %p58
      %p60 = scmp.ne.s32.totalorder %s49, %s50
      %p61 = scmp.eq.s32.totalorder %s29, 0
      %p62 = por %p60, %p61
      %p63 = scmp.ne.s32.totalorder %s49, %s50
      %p64 = scmp.eq.s32.totalorder %s30, 1
      %p65 = por %p63, %p64
      %p67 = scmp.ne.s32.totalorder %s50, %s66
      %p68 = scmp.eq.s32.totalorder %s30, 0
      %p69 = por %p67, %p68
      %s70 = ssub.s32 %s32, %s39
      %p71 = scmp.eq.s32.totalorder %s70, 0
      %s73 = sadd.s32 %s72, 1
      %s74 = scalar_select %p71, %s72, %s73
      %p77 = pneg %p71
      %p78 = scmp.eq.s32.totalorder %s24, 1
      %p79 = por %p77, %p78
      %p80 = scmp.ne.s32.totalorder %s72, %s75
      %p81 = scmp.eq.s32.totalorder %s24, 0
      %p82 = por %p80, %p81
      %p83 = scmp.ne.s32.totalorder %s72, %s75
      %p84 = scmp.eq.s32.totalorder %s29, 1
      %p85 = por %p83, %p84
      %p86 = scmp.ne.s32.totalorder %s75, %s76
      %p87 = scmp.eq.s32.totalorder %s29, 0
      %p88 = por %p86, %p87
      %p89 = scmp.ne.s32.totalorder %s75, %s76
      %p90 = scmp.eq.s32.totalorder %s30, 1
      %p91 = por %p89, %p90
      %p93 = scmp.ne.s32.totalorder %s76, %s92
      %p94 = scmp.eq.s32.totalorder %s30, 0
      %p95 = por %p93, %p94
      %s96 = ssub.s32 %s32, %s39
      %p97 = scmp.eq.s32.totalorder %s96, 0
      %s99 = sadd.s32 %s98, 1
      %s100 = scalar_select %p97, %s98, %s99
      %p103 = pneg %p97
      %p104 = scmp.eq.s32.totalorder %s24, 1
      %p105 = por %p103, %p104
      %p106 = scmp.ne.s32.totalorder %s98, %s101
      %p107 = scmp.eq.s32.totalorder %s24, 0
      %p108 = por %p106, %p107
      %p109 = scmp.ne.s32.totalorder %s98, %s101
      %p110 = scmp.eq.s32.totalorder %s29, 1
      %p111 = por %p109, %p110
      %p112 = scmp.ne.s32.totalorder %s101, %s102
      %p113 = scmp.eq.s32.totalorder %s29, 0
      %p114 = por %p112, %p113
      %p115 = scmp.ne.s32.totalorder %s101, %s102
      %p116 = scmp.eq.s32.totalorder %s30, 1
      %p117 = por %p115, %p116
      %p119 = scmp.ne.s32.totalorder %s102, %s118
      %p120 = scmp.eq.s32.totalorder %s30, 0
      %p121 = por %p119, %p120
      %s122 = ssub.s32 %s32, %s39
      %p123 = scmp.eq.s32.totalorder %s122, 0
      %s125 = sadd.s32 %s124, 1
      %s126 = scalar_select %p123, %s124, %s125
      %p129 = pneg %p123
      %p130 = scmp.eq.s32.totalorder %s24, 1
      %p131 = por %p129, %p130
      %p132 = scmp.ne.s32.totalorder %s124, %s127
      %p133 = scmp.eq.s32.totalorder %s24, 0
      %p134 = por %p132, %p133
      %p135 = scmp.ne.s32.totalorder %s124, %s127
      %p136 = scmp.eq.s32.totalorder %s29, 1
      %p137 = por %p135, %p136
      %p138 = scmp.ne.s32.totalorder %s127, %s128
      %p139 = scmp.eq.s32.totalorder %s29, 0
      %p140 = por %p138, %p139
      %p141 = scmp.ne.s32.totalorder %s127, %s128
      %p142 = scmp.eq.s32.totalorder %s30, 1
      %p143 = por %p141, %p142
      %p145 = scmp.ne.s32.totalorder %s128, %s144
      %p146 = scmp.eq.s32.totalorder %s30, 0
      %p147 = por %p145, %p146
      %s148 = ssub.s32 %s32, %s39
      %p149 = scmp.eq.s32.totalorder %s148, 0
      %s151 = sadd.s32 %s150, 1
      %s152 = scalar_select %p149, %s150, %s151
      %p155 = pneg %p149
      %p156 = scmp.eq.s32.totalorder %s24, 1
      %p157 = por %p155, %p156
      %p158 = scmp.ne.s32.totalorder %s150, %s153
      %p159 = scmp.eq.s32.totalorder %s24, 0
      %p160 = por %p158, %p159
      %p161 = scmp.ne.s32.totalorder %s150, %s153
      %p162 = scmp.eq.s32.totalorder %s29, 1
      %p163 = por %p161, %p162
      %p164 = scmp.ne.s32.totalorder %s153, %s154
      %p165 = scmp.eq.s32.totalorder %s29, 0
      %p166 = por %p164, %p165
      %p167 = scmp.ne.s32.totalorder %s153, %s154
      %p168 = scmp.eq.s32.totalorder %s30, 1
      %p169 = por %p167, %p168
      %p171 = scmp.ne.s32.totalorder %s154, %s170
      %p172 = scmp.eq.s32.totalorder %s30, 0
      %p173 = por %p171, %p172
      %s174 = ssub.s32 %s32, %s39
      %p175 = scmp.eq.s32.totalorder %s174, 0
      %s177 = sadd.s32 %s176, 1
      %s178 = scalar_select %p175, %s176, %s177
      %p181 = pneg %p175
      %p182 = scmp.eq.s32.totalorder %s24, 1
      %p183 = por %p181, %p182
      %p184 = scmp.ne.s32.totalorder %s176, %s179
      %p185 = scmp.eq.s32.totalorder %s24, 0
      %p186 = por %p184, %p185
      %p187 = scmp.ne.s32.totalorder %s176, %s179
      %p188 = scmp.eq.s32.totalorder %s29, 1
      %p189 = por %p187, %p188
      %p190 = scmp.ne.s32.totalorder %s179, %s180
      %p191 = scmp.eq.s32.totalorder %s29, 0
      %p192 = por %p190, %p191
      %p193 = scmp.ne.s32.totalorder %s179, %s180
      %p194 = scmp.eq.s32.totalorder %s30, 1
      %p195 = por %p193, %p194
      %p197 = scmp.ne.s32.totalorder %s180, %s196
      %p198 = scmp.eq.s32.totalorder %s30, 0
      %p199 = por %p197, %p198
      %s200 = ssub.s32 %s32, %s39
      %p201 = scmp.eq.s32.totalorder %s200, 0
      %s203 = sadd.s32 %s202, 1
      %s204 = scalar_select %p201, %s202, %s203
      %p207 = pneg %p201
      %p208 = scmp.eq.s32.totalorder %s24, 1
      %p209 = por %p207, %p208
      %p210 = scmp.ne.s32.totalorder %s202, %s205
      %p211 = scmp.eq.s32.totalorder %s24, 0
      %p212 = por %p210, %p211
      %p213 = scmp.ne.s32.totalorder %s202, %s205
      %p214 = scmp.eq.s32.totalorder %s29, 1
      %p215 = por %p213, %p214
      %p216 = scmp.ne.s32.totalorder %s205, %s206
      %p217 = scmp.eq.s32.totalorder %s29, 0
      %p218 = por %p216, %p217
      %p219 = scmp.ne.s32.totalorder %s205, %s206
      %p220 = scmp.eq.s32.totalorder %s30, 1
      %p221 = por %p219, %p220
      %p223 = scmp.ne.s32.totalorder %s206, %s222
      %p224 = scmp.eq.s32.totalorder %s30, 0
      %p225 = por %p223, %p224
      %s226 = ssub.s32 %s32, %s39
      %p227 = scmp.eq.s32.totalorder %s226, 0
      %s229 = sadd.s32 %s228, 1
      %s230 = scalar_select %p227, %s228, %s229
      %p233 = pneg %p227
      %p234 = scmp.eq.s32.totalorder %s24, 1
      %p235 = por %p233, %p234
      %p236 = scmp.ne.s32.totalorder %s228, %s231
      %p237 = scmp.eq.s32.totalorder %s24, 0
      %p238 = por %p236, %p237
      %p239 = scmp.ne.s32.totalorder %s228, %s231
      %p240 = scmp.eq.s32.totalorder %s29, 1
      %p241 = por %p239, %p240
      %p242 = scmp.ne.s32.totalorder %s231, %s232
      %p243 = scmp.eq.s32.totalorder %s29, 0
      %p244 = por %p242, %p243
      %p245 = scmp.ne.s32.totalorder %s231, %s232
      %p246 = scmp.eq.s32.totalorder %s30, 1
      %p247 = por %p245, %p246
      %p249 = scmp.ne.s32.totalorder %s232, %s248
      %p250 = scmp.eq.s32.totalorder %s30, 0
      %p251 = por %p249, %p250
      %s252 = ssub.s32 %s32, %s39
      %p253 = scmp.eq.s32.totalorder %s252, 0
      %s255 = sadd.s32 %s254, 1
      %s256 = scalar_select %p253, %s254, %s255
      %p259 = pneg %p253
      %p260 = scmp.eq.s32.totalorder %s24, 1
      %p261 = por %p259, %p260
      %p262 = scmp.ne.s32.totalorder %s254, %s257
      %p263 = scmp.eq.s32.totalorder %s24, 0
      %p264 = por %p262, %p263
      %p265 = scmp.ne.s32.totalorder %s254, %s257
      %p266 = scmp.eq.s32.totalorder %s29, 1
      %p267 = por %p265, %p266
      %p268 = scmp.ne.s32.totalorder %s257, %s258
      %p269 = scmp.eq.s32.totalorder %s29, 0
      %p270 = por %p268, %p269
      %p271 = scmp.ne.s32.totalorder %s257, %s258
      %p272 = scmp.eq.s32.totalorder %s30, 1
      %p273 = por %p271, %p272
      %p275 = scmp.ne.s32.totalorder %s258, %s274
      %p276 = scmp.eq.s32.totalorder %s30, 0
      %p277 = por %p275, %p276
      %s278 = ssub.s32 %s32, %s39
      %p279 = scmp.eq.s32.totalorder %s278, 0
      %s281 = sadd.s32 %s280, 1
      %s282 = scalar_select %p279, %s280, %s281
      %p285 = pneg %p279
      %p286 = scmp.eq.s32.totalorder %s24, 1
      %p287 = por %p285, %p286
      %p288 = scmp.ne.s32.totalorder %s280, %s283
      %p289 = scmp.eq.s32.totalorder %s24, 0
      %p290 = por %p288, %p289
      %p291 = scmp.ne.s32.totalorder %s280, %s283
      %p292 = scmp.eq.s32.totalorder %s29, 1
      %p293 = por %p291, %p292
      %p294 = scmp.ne.s32.totalorder %s283, %s284
      %p295 = scmp.eq.s32.totalorder %s29, 0
      %p296 = por %p294, %p295
      %p297 = scmp.ne.s32.totalorder %s283, %s284
      %p298 = scmp.eq.s32.totalorder %s30, 1
      %p299 = por %p297, %p298
      %p301 = scmp.ne.s32.totalorder %s284, %s300
      %p302 = scmp.eq.s32.totalorder %s30, 0
      %p303 = por %p301, %p302
      %s304 = ssub.s32 %s32, %s39
      %p305 = scmp.eq.s32.totalorder %s304, 0
      %s307 = sadd.s32 %s306, 1
      %s308 = scalar_select %p305, %s306, %s307
      %p311 = pneg %p305
      %p312 = scmp.eq.s32.totalorder %s24, 1
      %p313 = por %p311, %p312
      %p314 = scmp.ne.s32.totalorder %s306, %s309
      %p315 = scmp.eq.s32.totalorder %s24, 0
      %p316 = por %p314, %p315
      %p317 = scmp.ne.s32.totalorder %s306, %s309
      %p318 = scmp.eq.s32.totalorder %s29, 1
      %p319 = por %p317, %p318
      %p320 = scmp.ne.s32.totalorder %s309, %s310
      %p321 = scmp.eq.s32.totalorder %s29, 0
      %p322 = por %p320, %p321
      %p323 = scmp.ne.s32.totalorder %s309, %s310
      %p324 = scmp.eq.s32.totalorder %s30, 1
      %p325 = por %p323, %p324
      %p327 = scmp.ne.s32.totalorder %s310, %s326
      %p328 = scmp.eq.s32.totalorder %s30, 0
      %p329 = por %p327, %p328
      %s330 = ssub.s32 %s32, %s39
      %p331 = scmp.eq.s32.totalorder %s330, 0
      %s333 = sadd.s32 %s332, 1
      %s334 = scalar_select %p331, %s332, %s333
      %p337 = pneg %p331
      %p338 = scmp.eq.s32.totalorder %s24, 1
      %p339 = por %p337, %p338
      %p340 = scmp.ne.s32.totalorder %s332, %s335
      %p341 = scmp.eq.s32.totalorder %s24, 0
      %p342 = por %p340, %p341
      %p343 = scmp.ne.s32.totalorder %s332, %s335
      %p344 = scmp.eq.s32.totalorder %s29, 1
      %p345 = por %p343, %p344
      %p346 = scmp.ne.s32.totalorder %s335, %s336
      %p347 = scmp.eq.s32.totalorder %s29, 0
      %p348 = por %p346, %p347
      %p349 = scmp.ne.s32.totalorder %s335, %s336
      %p350 = scmp.eq.s32.totalorder %s30, 1
      %p351 = por %p349, %p350
      %p353 = scmp.ne.s32.totalorder %s336, %s352
      %p354 = scmp.eq.s32.totalorder %s30, 0
      %p355 = por %p353, %p354
      %s356 = ssub.s32 %s32, %s39
      %p357 = scmp.eq.s32.totalorder %s356, 0
      %s359 = sadd.s32 %s358, 1
      %s360 = scalar_select %p357, %s358, %s359
      %p363 = pneg %p357
      %p364 = scmp.eq.s32.totalorder %s24, 1
      %p365 = por %p363, %p364
      %p366 = scmp.ne.s32.totalorder %s358, %s361
      %p367 = scmp.eq.s32.totalorder %s24, 0
      %p368 = por %p366, %p367
      %p369 = scmp.ne.s32.totalorder %s358, %s361
      %p370 = scmp.eq.s32.totalorder %s29, 1
      %p371 = por %p369, %p370
      %p372 = scmp.ne.s32.totalorder %s361, %s362
      %p373 = scmp.eq.s32.totalorder %s29, 0
      %p374 = por %p372, %p373
      %p375 = scmp.ne.s32.totalorder %s361, %s362
      %p376 = scmp.eq.s32.totalorder %s30, 1
      %p377 = por %p375, %p376
      %p379 = scmp.ne.s32.totalorder %s362, %s378
      %p380 = scmp.eq.s32.totalorder %s30, 0
      %p381 = por %p379, %p380
      %s383 = sadd.s32 %s382, 1
      %p386 = scmp.eq.s32.totalorder %s24, 1
      %p387 = scmp.ne.s32.totalorder %s382, %s384
      %p388 = scmp.eq.s32.totalorder %s24, 0
      %p389 = por %p387, %p388
      %p390 = scmp.ne.s32.totalorder %s382, %s384
      %p391 = scmp.eq.s32.totalorder %s29, 1
      %p392 = por %p390, %p391
      %p393 = scmp.ne.s32.totalorder %s384, %s385
      %p394 = scmp.eq.s32.totalorder %s29, 0
      %p395 = por %p393, %p394
      %p396 = scmp.ne.s32.totalorder %s384, %s385
      %p397 = scmp.eq.s32.totalorder %s30, 1
      %p398 = por %p396, %p397
      %p400 = scmp.ne.s32.totalorder %s385, %s399
      %p401 = scmp.eq.s32.totalorder %s30, 0
      %p402 = por %p400, %p401
      %s404 = sadd.s32 %s403, 1
      %p407 = scmp.eq.s32.totalorder %s24, 1
      %p408 = scmp.ne.s32.totalorder %s403, %s405
      %p409 = scmp.eq.s32.totalorder %s24, 0
      %p410 = por %p408, %p409
      %p411 = scmp.ne.s32.totalorder %s403, %s405
      %p412 = scmp.eq.s32.totalorder %s29, 1
      %p413 = por %p411, %p412
      %p414 = scmp.ne.s32.totalorder %s405, %s406
      %p415 = scmp.eq.s32.totalorder %s29, 0
      %p416 = por %p414, %p415
      %p417 = scmp.ne.s32.totalorder %s405, %s406
      %p418 = scmp.eq.s32.totalorder %s30, 1
      %p419 = por %p417, %p418
      %p421 = scmp.ne.s32.totalorder %s406, %s420
      %p422 = scmp.eq.s32.totalorder %s30, 0
      %p423 = por %p421, %p422
      %s425 = sadd.s32 %s424, 1
      %p428 = scmp.eq.s32.totalorder %s24, 1
      %p429 = scmp.ne.s32.totalorder %s424, %s426
      %p430 = scmp.eq.s32.totalorder %s24, 0
      %p431 = por %p429, %p430
      %p432 = scmp.ne.s32.totalorder %s424, %s426
      %p433 = scmp.eq.s32.totalorder %s29, 1
      %p434 = por %p432, %p433
      %p435 = scmp.ne.s32.totalorder %s426, %s427
      %p436 = scmp.eq.s32.totalorder %s29, 0
      %p437 = por %p435, %p436
      %p438 = scmp.ne.s32.totalorder %s426, %s427
      %p439 = scmp.eq.s32.totalorder %s30, 1
      %p440 = por %p438, %p439
      %p442 = scmp.ne.s32.totalorder %s427, %s441
      %p443 = scmp.eq.s32.totalorder %s30, 0
      %p444 = por %p442, %p443
      %s446 = sadd.s32 %s445, 1
      %p449 = scmp.eq.s32.totalorder %s24, 1
      %p450 = scmp.ne.s32.totalorder %s445, %s447
      %p451 = scmp.eq.s32.totalorder %s24, 0
      %p452 = por %p450, %p451
      %p453 = scmp.ne.s32.totalorder %s445, %s447
      %p454 = scmp.eq.s32.totalorder %s29, 1
      %p455 = por %p453, %p454
      %p456 = scmp.ne.s32.totalorder %s447, %s448
      %p457 = scmp.eq.s32.totalorder %s29, 0
      %p458 = por %p456, %p457
      %p459 = scmp.ne.s32.totalorder %s447, %s448
      %p460 = scmp.eq.s32.totalorder %s30, 1
      %p461 = por %p459, %p460
      %p463 = scmp.ne.s32.totalorder %s448, %s462
      %p464 = scmp.eq.s32.totalorder %s30, 0
      %p465 = por %p463, %p464
      %s466 = ssub.s32 %s31, %s43
      %p467 = scmp.eq.s32.totalorder %s466, 0
      %s469 = sadd.s32 %s468, 1
      %s470 = scalar_select %p467, %s468, %s469
      %p473 = pneg %p467
      %p474 = scmp.eq.s32.totalorder %s24, 1
      %p475 = por %p473, %p474
      %p476 = scmp.ne.s32.totalorder %s468, %s471
      %p477 = scmp.eq.s32.totalorder %s24, 0
      %p478 = por %p476, %p477
      %p479 = scmp.ne.s32.totalorder %s468, %s471
      %p480 = scmp.eq.s32.totalorder %s29, 1
      %p481 = por %p479, %p480
      %p482 = scmp.ne.s32.totalorder %s471, %s472
      %p483 = scmp.eq.s32.totalorder %s29, 0
      %p484 = por %p482, %p483
      %p485 = scmp.ne.s32.totalorder %s471, %s472
      %p486 = scmp.eq.s32.totalorder %s30, 1
      %p487 = por %p485, %p486
      %p489 = scmp.ne.s32.totalorder %s472, %s488
      %p490 = scmp.eq.s32.totalorder %s30, 0
      %p491 = por %p489, %p490
      %p492 = scmp.le.s32.totalorder 1, %s24
      %p493 = scmp.lt.s32.totalorder %s24, 3
      %p494 = pnand %p492, %p493
      %p495 = pneg %p494
      // Predicated region
      $region9: #{_lambda_.1} parent=5 // pred_check
        _
      $region10: #{_lambda_.1} parent=5 // pred_check_branch
        %497 = sbr.rel (%p494) target = $region12
      $region11: #{_lambda_.1} parent=5 // pred_region
        %s498 = ssub.s32 %s24, 1
        // Predicated region
        $region13: #{_lambda_.1} parent=11 // pred_check
          %p499 = pneg %p62
        $region14: #{_lambda_.1} parent=11 // pred_check_branch
          %501 = sbr.rel (%p499) target = $region16
        $region15: #{_lambda_.1} parent=11 // pred_region
          %s502 = smul.u32 2, %s33
          %p503 = scmp.lt.s32.totalorder %s502, 1
          %s504 = scalar_select %p503, %s502, 1
          %s505 = smul.addr %s504, 2
          %s506 = smul.addr %s505, 8
          %s507 = scalar_lea.vmem %s0, %s506
          %s508 = smul.u32 2, %s33
        $region16: #{_lambda_.1} parent=11 // pred_fallthru
          _
        // Predicated region
        $region17: #{_lambda_.1} parent=11 // pred_check
          %p509 = pneg %p395
        $region18: #{_lambda_.1} parent=11 // pred_check_branch
          %511 = sbr.rel (%p509) target = $region20
        $region19: #{_lambda_.1} parent=11 // pred_region
          _
        $region20: #{_lambda_.1} parent=11 // pred_fallthru
          _
        // Predicated region
        $region21: #{_lambda_.1} parent=11 // pred_check
          %p512 = pneg %p416
        $region22: #{_lambda_.1} parent=11 // pred_check_branch
          %514 = sbr.rel (%p512) target = $region24
        $region23: #{_lambda_.1} parent=11 // pred_region
          _
        $region24: #{_lambda_.1} parent=11 // pred_fallthru
          _
        // Predicated region
        $region25: #{_lambda_.1} parent=11 // pred_check
          %p515 = pneg %p437
        $region26: #{_lambda_.1} parent=11 // pred_check_branch
          %517 = sbr.rel (%p515) target = $region28
        $region27: #{_lambda_.1} parent=11 // pred_region
          _
        $region28: #{_lambda_.1} parent=11 // pred_fallthru
          _
        // Predicated region
        $region29: #{_lambda_.1} parent=11 // pred_check
          %p518 = pneg %p458
        $region30: #{_lambda_.1} parent=11 // pred_check_branch
          %520 = sbr.rel (%p518) target = $region32
        $region31: #{_lambda_.1} parent=11 // pred_region
          _
        $region32: #{_lambda_.1} parent=11 // pred_fallthru
          _
      $region12: #{_lambda_.1} parent=5 // pred_fallthru
        _
      %p521 = scmp.lt.s32.totalorder %s24, 2
      // Predicated region
      $region33: #{_lambda_.1} parent=5 // pred_check
        %p522 = pneg %p521
      $region34: #{_lambda_.1} parent=5 // pred_check_branch
        %524 = sbr.rel (%p522) target = $region36
      $region35: #{_lambda_.1} parent=5 // pred_region
        // Predicated region
        $region37: #{_lambda_.1} parent=35 // pred_check
          %p525 = pneg %p82
        $region38: #{_lambda_.1} parent=35 // pred_check_branch
          %527 = sbr.rel (%p525) target = $region40
        $region39: #{_lambda_.1} parent=35 // pred_region
          %p528 = scmp.lt.s32.totalorder %s32, 1
          %s529 = scalar_select %p528, %s32, 1
          %s530 = scalar_lea.vmem %s1, %s529
        $region40: #{_lambda_.1} parent=35 // pred_fallthru
          _
        // Predicated region
        $region41: #{_lambda_.1} parent=35 // pred_check
          %p531 = pneg %p108
        $region42: #{_lambda_.1} parent=35 // pred_check_branch
          %533 = sbr.rel (%p531) target = $region44
        $region43: #{_lambda_.1} parent=35 // pred_region
          %p534 = scmp.lt.s32.totalorder %s32, 1
          %s535 = scalar_select %p534, %s32, 1
          %s536 = scalar_lea.vmem %s2, %s535
        $region44: #{_lambda_.1} parent=35 // pred_fallthru
          _
        // Predicated region
        $region45: #{_lambda_.1} parent=35 // pred_check
          %p537 = pneg %p134
        $region46: #{_lambda_.1} parent=35 // pred_check_branch
          %539 = sbr.rel (%p537) target = $region48
        $region47: #{_lambda_.1} parent=35 // pred_region
          %p540 = scmp.lt.s32.totalorder %s32, 1
          %s541 = scalar_select %p540, %s32, 1
          %s542 = smul.addr %s541, 4
          %s543 = smul.addr %s542, 8
          %s544 = scalar_lea.vmem %s3, %s543
        $region48: #{_lambda_.1} parent=35 // pred_fallthru
          _
        // Predicated region
        $region49: #{_lambda_.1} parent=35 // pred_check
          %p545 = pneg %p160
        $region50: #{_lambda_.1} parent=35 // pred_check_branch
          %547 = sbr.rel (%p545) target = $region52
        $region51: #{_lambda_.1} parent=35 // pred_region
          %p548 = scmp.lt.s32.totalorder %s32, 1
          %s549 = scalar_select %p548, %s32, 1
          %s550 = scalar_lea.vmem %s4, %s549
        $region52: #{_lambda_.1} parent=35 // pred_fallthru
          _
        // Predicated region
        $region53: #{_lambda_.1} parent=35 // pred_check
          %p551 = pneg %p186
        $region54: #{_lambda_.1} parent=35 // pred_check_branch
          %553 = sbr.rel (%p551) target = $region56
        $region55: #{_lambda_.1} parent=35 // pred_region
          %p554 = scmp.lt.s32.totalorder %s32, 1
          %s555 = scalar_select %p554, %s32, 1
          %s556 = smul.addr %s555, 4
          %s557 = smul.addr %s556, 8
          %s558 = scalar_lea.vmem %s5, %s557
        $region56: #{_lambda_.1} parent=35 // pred_fallthru
          _
        // Predicated region
        $region57: #{_lambda_.1} parent=35 // pred_check
          %p559 = pneg %p212
        $region58: #{_lambda_.1} parent=35 // pred_check_branch
          %561 = sbr.rel (%p559) target = $region60
        $region59: #{_lambda_.1} parent=35 // pred_region
          %p562 = scmp.lt.s32.totalorder %s32, 1
          %s563 = scalar_select %p562, %s32, 1
          %s564 = scalar_lea.vmem %s6, %s563
        $region60: #{_lambda_.1} parent=35 // pred_fallthru
          _
        // Predicated region
        $region61: #{_lambda_.1} parent=35 // pred_check
          %p565 = pneg %p238
        $region62: #{_lambda_.1} parent=35 // pred_check_branch
          %567 = sbr.rel (%p565) target = $region64
        $region63: #{_lambda_.1} parent=35 // pred_region
          %p568 = scmp.lt.s32.totalorder %s32, 1
          %s569 = scalar_select %p568, %s32, 1
          %s570 = scalar_lea.vmem %s7, %s569
        $region64: #{_lambda_.1} parent=35 // pred_fallthru
          _
        // Predicated region
        $region65: #{_lambda_.1} parent=35 // pred_check
          %p571 = pneg %p264
        $region66: #{_lambda_.1} parent=35 // pred_check_branch
          %573 = sbr.rel (%p571) target = $region68
        $region67: #{_lambda_.1} parent=35 // pred_region
          %p574 = scmp.lt.s32.totalorder %s32, 1
          %s575 = scalar_select %p574, %s32, 1
          %s576 = scalar_lea.vmem %s8, %s575
        $region68: #{_lambda_.1} parent=35 // pred_fallthru
          _
        // Predicated region
        $region69: #{_lambda_.1} parent=35 // pred_check
          %p577 = pneg %p290
        $region70: #{_lambda_.1} parent=35 // pred_check_branch
          %579 = sbr.rel (%p577) target = $region72
        $region71: #{_lambda_.1} parent=35 // pred_region
          %p580 = scmp.lt.s32.totalorder %s32, 1
          %s581 = scalar_select %p580, %s32, 1
          %s582 = smul.addr %s581, 4
          %s583 = smul.addr %s582, 8
          %s584 = scalar_lea.vmem %s9, %s583
        $region72: #{_lambda_.1} parent=35 // pred_fallthru
          _
        // Predicated region
        $region73: #{_lambda_.1} parent=35 // pred_check
          %p585 = pneg %p316
        $region74: #{_lambda_.1} parent=35 // pred_check_branch
          %587 = sbr.rel (%p585) target = $region76
        $region75: #{_lambda_.1} parent=35 // pred_region
          %p588 = scmp.lt.s32.totalorder %s32, 1
          %s589 = scalar_select %p588, %s32, 1
          %s590 = scalar_lea.vmem %s10, %s589
        $region76: #{_lambda_.1} parent=35 // pred_fallthru
          _
        // Predicated region
        $region77: #{_lambda_.1} parent=35 // pred_check
          %p591 = pneg %p342
        $region78: #{_lambda_.1} parent=35 // pred_check_branch
          %593 = sbr.rel (%p591) target = $region80
        $region79: #{_lambda_.1} parent=35 // pred_region
          %p594 = scmp.lt.s32.totalorder %s32, 1
          %s595 = scalar_select %p594, %s32, 1
          %s596 = smul.addr %s595, 8
          %s597 = smul.addr %s596, 8
          %s598 = scalar_lea.vmem %s11, %s597
        $region80: #{_lambda_.1} parent=35 // pred_fallthru
          _
        // Predicated region
        $region81: #{_lambda_.1} parent=35 // pred_check
          %p599 = pneg %p368
        $region82: #{_lambda_.1} parent=35 // pred_check_branch
          %601 = sbr.rel (%p599) target = $region84
        $region83: #{_lambda_.1} parent=35 // pred_region
          %p602 = scmp.lt.s32.totalorder %s32, 1
          %s603 = scalar_select %p602, %s32, 1
          %s604 = scalar_lea.vmem %s12, %s603
        $region84: #{_lambda_.1} parent=35 // pred_fallthru
          _
      $region36: #{_lambda_.1} parent=5 // pred_fallthru
        _
      %p605 = scmp.le.s32.totalorder 1, %s24
      %p606 = scmp.lt.s32.totalorder %s24, 3
      %p607 = pnand %p605, %p606
      %p608 = pneg %p607
      // Predicated region
      $region85: #{_lambda_.1} parent=5 // pred_check
        _
      $region86: #{_lambda_.1} parent=5 // pred_check_branch
        %610 = sbr.rel (%p607) target = $region88
      $region87: #{_lambda_.1} parent=5 // pred_region
        %s611 = ssub.s32 %s24, 1
        %s612 = smul.u32 2, %s33
        %p613 = scmp.lt.s32.totalorder %s612, 1
        %s614 = scalar_select %p613, %s612, 1
        %s615 = smul.addr %s614, 2
        %s616 = smul.addr %s615, 8
        %s617 = scalar_lea.vmem %s0, %s616
        %p618 = pneg %p62
        %p619 = pneg %p59
        %p620 = scmp.lt.s32.totalorder %s34, 1
        %s621 = scalar_select %p620, %s34, 1
        %s622 = scalar_lea.vmem %s1, %s621
        %p623 = pneg %p88
        %p624 = pneg %p85
        %p625 = scmp.lt.s32.totalorder %s34, 1
        %s626 = scalar_select %p625, %s34, 1
        %s627 = scalar_lea.vmem %s2, %s626
        %p628 = pneg %p114
        %p629 = pneg %p111
        %p630 = scmp.lt.s32.totalorder %s34, 1
        %s631 = scalar_select %p630, %s34, 1
        %s632 = smul.addr %s631, 4
        %s633 = smul.addr %s632, 8
        %s634 = scalar_lea.vmem %s3, %s633
        %p635 = pneg %p140
        %p636 = pneg %p137
        %p637 = scmp.lt.s32.totalorder %s34, 1
        %s638 = scalar_select %p637, %s34, 1
        %s639 = scalar_lea.vmem %s4, %s638
        %p640 = pneg %p166
        %p641 = pneg %p163
        %p642 = scmp.lt.s32.totalorder %s34, 1
        %s643 = scalar_select %p642, %s34, 1
        %s644 = smul.addr %s643, 4
        %s645 = smul.addr %s644, 8
        %s646 = scalar_lea.vmem %s5, %s645
        %p647 = pneg %p192
        %p648 = pneg %p189
        %p649 = scmp.lt.s32.totalorder %s34, 1
        %s650 = scalar_select %p649, %s34, 1
        %s651 = scalar_lea.vmem %s6, %s650
        %p652 = pneg %p218
        %p653 = pneg %p215
        %p654 = scmp.lt.s32.totalorder %s34, 1
        %s655 = scalar_select %p654, %s34, 1
        %s656 = scalar_lea.vmem %s7, %s655
        %p657 = pneg %p244
        %p658 = pneg %p241
        %p659 = scmp.lt.s32.totalorder %s34, 1
        %s660 = scalar_select %p659, %s34, 1
        %s661 = scalar_lea.vmem %s8, %s660
        %p662 = pneg %p270
        %p663 = pneg %p267
        %p664 = scmp.lt.s32.totalorder %s34, 1
        %s665 = scalar_select %p664, %s34, 1
        %s666 = smul.addr %s665, 4
        %s667 = smul.addr %s666, 8
        %s668 = scalar_lea.vmem %s9, %s667
        %p669 = pneg %p296
        %p670 = pneg %p293
        %p671 = scmp.lt.s32.totalorder %s34, 1
        %s672 = scalar_select %p671, %s34, 1
        %s673 = scalar_lea.vmem %s10, %s672
        %p674 = pneg %p322
        %p675 = pneg %p319
        %p676 = scmp.lt.s32.totalorder %s34, 1
        %s677 = scalar_select %p676, %s34, 1
        %s678 = smul.addr %s677, 8
        %s679 = smul.addr %s678, 8
        %s680 = scalar_lea.vmem %s11, %s679
        %p681 = pneg %p348
        %p682 = pneg %p345
        %p683 = scmp.lt.s32.totalorder %s34, 1
        %s684 = scalar_select %p683, %s34, 1
        %s685 = scalar_lea.vmem %s12, %s684
        %p686 = pneg %p374
        %p687 = pneg %p371
        %p688 = pneg %p395
        %p689 = pneg %p392
        %p690 = pneg %p416
        %p691 = pneg %p413
        %p692 = pneg %p437
        %p693 = pneg %p434
        %p694 = pneg %p458
        %p695 = pneg %p455
        %p696 = pneg %p484
        %p697 = pneg %p481
        %s698 = smul.u32 2, %s33
        %p699 = scmp.lt.s32.totalorder %s698, 1
        %s700 = scalar_select %p699, %s698, 1
        %s701 = smul.addr %s700, 2
        %s702 = smul.addr %s701, 8
        %s703 = scalar_lea.vmem %s0, %s702
        %s704 = smul.u32 2, %s33
        %p705 = scmp.lt.s32.totalorder %s34, 1
        %s706 = scalar_select %p705, %s34, 1
        %s707 = scalar_lea.vmem %s1, %s706
        %p708 = scmp.lt.s32.totalorder %s34, 1
        %s709 = scalar_select %p708, %s34, 1
        %s710 = scalar_lea.vmem %s2, %s709
        %p711 = scmp.lt.s32.totalorder %s34, 1
        %s712 = scalar_select %p711, %s34, 1
        %s713 = smul.addr %s712, 4
        %s714 = smul.addr %s713, 8
        %s715 = scalar_lea.vmem %s3, %s714
        %p716 = scmp.lt.s32.totalorder %s34, 1
        %s717 = scalar_select %p716, %s34, 1
        %s718 = scalar_lea.vmem %s4, %s717
        %p719 = scmp.lt.s32.totalorder %s34, 1
        %s720 = scalar_select %p719, %s34, 1
        %s721 = smul.addr %s720, 4
        %s722 = smul.addr %s721, 8
        %s723 = scalar_lea.vmem %s5, %s722
        %p724 = scmp.lt.s32.totalorder %s34, 1
        %s725 = scalar_select %p724, %s34, 1
        %s726 = scalar_lea.vmem %s6, %s725
        %p727 = scmp.lt.s32.totalorder %s34, 1
        %s728 = scalar_select %p727, %s34, 1
        %s729 = scalar_lea.vmem %s7, %s728
        %p730 = scmp.lt.s32.totalorder %s34, 1
        %s731 = scalar_select %p730, %s34, 1
        %s732 = scalar_lea.vmem %s8, %s731
        %p733 = scmp.lt.s32.totalorder %s34, 1
        %s734 = scalar_select %p733, %s34, 1
        %s735 = smul.addr %s734, 4
        %s736 = smul.addr %s735, 8
        %s737 = scalar_lea.vmem %s9, %s736
        %p738 = scmp.lt.s32.totalorder %s34, 1
        %s739 = scalar_select %p738, %s34, 1
        %s740 = scalar_lea.vmem %s10, %s739
        %p741 = scmp.lt.s32.totalorder %s34, 1
        %s742 = scalar_select %p741, %s34, 1
        %s743 = smul.addr %s742, 8
        %s744 = smul.addr %s743, 8
        %s745 = scalar_lea.vmem %s11, %s744
        %p746 = scmp.lt.s32.totalorder %s34, 1
        %s747 = scalar_select %p746, %s34, 1
        %s748 = scalar_lea.vmem %s12, %s747
        %p749 = scmp.eq.s32.totalorder %s34, 0
        // Predicated region
        $region89: #{_lambda_.1} parent=87 // pred_check
          %p750 = pneg %p749
        $region90: #{_lambda_.1} parent=87 // pred_check_branch
          %752 = sbr.rel (%p750) target = $region92
        $region91: #{_lambda_.1} parent=87 // pred_region
          %vm753 = vcmask 261120
          %754 = vst.msk [vmem:[#allocation2] sm:$0xff] %vm753, 0.0
          %755 = vst.msk [vmem:[#allocation2 + $0x8] sm:$0xff] %vm753, 0.0
          %756 = vst.msk [vmem:[#allocation2 + $0x10] sm:$0xff] %vm753, 0.0
          %757 = vst.msk [vmem:[#allocation2 + $0x18] sm:$0xff] %vm753, 0.0
          %758 = vst.msk [vmem:[#allocation4] sm:$0xff] %vm753, 0.0
          %759 = vst.msk [vmem:[#allocation4 + $0x8] sm:$0xff] %vm753, 0.0
          %760 = vst.msk [vmem:[#allocation4 + $0x10] sm:$0xff] %vm753, 0.0
          %761 = vst.msk [vmem:[#allocation4 + $0x18] sm:$0xff] %vm753, 0.0
          %v762 = vld [vmem:[%s703] sm:$0xff]
          %v763 = vld [vmem:[%s703 + $0x8] sm:$0x1]
          %764 = vst.msk [vmem:[#allocation2] sm:$0xff] %vm753, %v762
          %vm765 = vcmask 253952
          %766 = vst.msk [vmem:[#allocation2 + $0x8] sm:$0x1] %vm765, %v763
          %s767 = scalar_lea.vmem %s703, 16
          %v768 = vld [vmem:[%s767] sm:$0xff]
          %v769 = vld [vmem:[%s767 + $0x8] sm:$0x1]
          %770 = vst.msk [vmem:[#allocation2 + $0x10] sm:$0xff] %vm753, %v768
          %771 = vst.msk [vmem:[#allocation2 + $0x18] sm:$0x1] %vm765, %v769
        $region92: #{_lambda_.1} parent=87 // pred_fallthru
          _
        %v772 = vld [vmem:[#allocation2] sm:$0xff]
        %v773 = vld [vmem:[#allocation2 + $0x8] sm:$0xff]
        %v774 = vld [vmem:[#allocation2 + $0x10] sm:$0xff]
        %v775 = vld [vmem:[#allocation2 + $0x18] sm:$0xff]
        %v776 = vld [vmem:[%s707] sm:$0x1]
        %v777 = vld [vmem:[%s710] sm:$0x1]
        %v778 = vld [vmem:[%s729] sm:$0x1]
        %v779 = vld [vmem:[%s732] sm:$0x1]
        %vm780 = vcmask 261120
        %v781 = vsel %vm780, %v772, 0.0
        %782 = vadd.xlane.f32.xlu0 %v781
        %v783 = vpop.xlane.xlu0 %782
        %v784 = vsel %vm780, %v773, 0.0
        %785 = vadd.xlane.f32.xlu0 %v784
        %v786 = vpop.xlane.xlu0 %785
        %v787 = vsel %vm780, %v774, 0.0
        %788 = vadd.xlane.f32.xlu0 %v787
        %v789 = vpop.xlane.xlu0 %788
        %v790 = vsel %vm780, %v775, 0.0
        %791 = vadd.xlane.f32.xlu0 %v790
        %v792 = vpop.xlane.xlu0 %791
        %v793 = vrcp.pop 32.0
        %v794 = vmul.f32 32.0, %v793
        %v795 = vsub.f32 1.0, %v794
        %v796 = vmul.f32 %v793, %v795
        %v797 = vadd.f32 %v793, %v796
        %vm798 = vweird.f32 %v793
        %v799 = vsel %vm798, %v793, %v797
        %v800 = vmul.f32 %v783, %v799
        %v801 = vmul.f32 %v786, %v799
        %v802 = vmul.f32 %v789, %v799
        %v803 = vmul.f32 %v792, %v799
        %v804 = vsub.f32 %v772, %v800
        %v805 = vsub.f32 %v773, %v801
        %v806 = vsub.f32 %v774, %v802
        %v807 = vsub.f32 %v775, %v803
        %v808 = vmul.f32 %v804, %v804
        %v809 = vmul.f32 %v805, %v805
        %v810 = vmul.f32 %v806, %v806
        %v811 = vmul.f32 %v807, %v807
        %v812 = vsel %vm780, %v808, 0.0
        %813 = vadd.xlane.f32.xlu0 %v812
        %v814 = vpop.xlane.xlu0 %813
        %v815 = vsel %vm780, %v809, 0.0
        %816 = vadd.xlane.f32.xlu0 %v815
        %v817 = vpop.xlane.xlu0 %816
        %v818 = vsel %vm780, %v810, 0.0
        %819 = vadd.xlane.f32.xlu0 %v818
        %v820 = vpop.xlane.xlu0 %819
        %v821 = vsel %vm780, %v811, 0.0
        %822 = vadd.xlane.f32.xlu0 %v821
        %v823 = vpop.xlane.xlu0 %822
        %v824 = vmul.f32 %v814, %v799
        %v825 = vmul.f32 %v817, %v799
        %v826 = vmul.f32 %v820, %v799
        %v827 = vmul.f32 %v823, %v799
        %v828 = vadd.f32 %v824, 1e-05
        %v829 = vadd.f32 %v825, 1e-05
        %v830 = vadd.f32 %v826, 1e-05
        %v831 = vadd.f32 %v827, 1e-05
        %v832 = vrsqrt.pop %v828
        %v833 = vmul.f32 %v832, %v828
        %v834 = vmul.f32 %v833, %v832
        %v835 = vmul.f32 0.5, %v834
        %v836 = vsub.f32 1.5, %v835
        %v837 = vmul.f32 %v832, %v836
        %vm838 = vweird.f32 %v828
        %vm839 = vweird.f32 %v832
        %vm840 = vmor %vm838, %vm839
        %v841 = vsel %vm840, %v832, %v837
        %v842 = vrsqrt.pop %v829
        %v843 = vmul.f32 %v842, %v829
        %v844 = vmul.f32 %v843, %v842
        %v845 = vmul.f32 0.5, %v844
        %v846 = vsub.f32 1.5, %v845
        %v847 = vmul.f32 %v842, %v846
        %vm848 = vweird.f32 %v829
        %vm849 = vweird.f32 %v842
        %vm850 = vmor %vm848, %vm849
        %v851 = vsel %vm850, %v842, %v847
        %v852 = vrsqrt.pop %v830
        %v853 = vmul.f32 %v852, %v830
        %v854 = vmul.f32 %v853, %v852
        %v855 = vmul.f32 0.5, %v854
        %v856 = vsub.f32 1.5, %v855
        %v857 = vmul.f32 %v852, %v856
        %vm858 = vweird.f32 %v830
        %vm859 = vweird.f32 %v852
        %vm860 = vmor %vm858, %vm859
        %v861 = vsel %vm860, %v852, %v857
        %v862 = vrsqrt.pop %v831
        %v863 = vmul.f32 %v862, %v831
        %v864 = vmul.f32 %v863, %v862
        %v865 = vmul.f32 0.5, %v864
        %v866 = vsub.f32 1.5, %v865
        %v867 = vmul.f32 %v862, %v866
        %vm868 = vweird.f32 %v831
        %vm869 = vweird.f32 %v862
        %vm870 = vmor %vm868, %vm869
        %v871 = vsel %vm870, %v862, %v867
        %v872 = vmul.f32 %v804, %v841
        %v873 = vmul.f32 %v805, %v851
        %v874 = vmul.f32 %v806, %v861
        %v875 = vmul.f32 %v807, %v871
        %v877 = vperm.slane %v776, 0
        %v879 = vmul.f32 %v872, %v877
        %v880 = vmul.f32 %v873, %v877
        %v881 = vmul.f32 %v874, %v877
        %v882 = vmul.f32 %v875, %v877
        %v884 = vperm.slane %v777, 0
        %v886 = vadd.f32 %v879, %v884
        %v887 = vadd.f32 %v880, %v884
        %v888 = vadd.f32 %v881, %v884
        %v889 = vadd.f32 %v882, %v884
        %s890 = scalar_select %p749, 1, 0
        %v891 = vstv %s890
        %vm892 = vcmp.eq.s32.totalorder %v891, 1
        %v893 = vsel %vm892, %v772, %v886
        %v894 = vsel %vm892, %v773, %v887
        %v895 = vsel %vm892, %v774, %v888
        %v896 = vsel %vm892, %v775, %v889
        %v897 = vld [vmem:[%s715] sm:$0xff]
        %v898 = vld [vmem:[%s715 + $0x8] sm:$0xff]
        %v899 = vld [vmem:[%s715 + $0x10] sm:$0xff]
        %v900 = vld [vmem:[%s715 + $0x18] sm:$0xff]
        %v901 = vld [vmem:[%s718] sm:$0x1]
        %v903 = vperm.slane %v901, 0
        %v906 = vsel %vm780, %v893, 0
        %v909 = vsel %vm780, %v894, 0
        %v912 = vsel %vm780, %v895, 0
        %v915 = vsel %vm780, %v896, 0
        %917 = vmatpush.msra.mxu0 0.0
        %918 = vmatpush.msra.mxu0 0.0
        %919 = vmatpush.msra.mxu0 0.0
        %920 = vmatpush.msra.mxu0 0.0
        %921 = vmatpush.msra.mxu0 0.0
        %922 = vmatpush.msra.mxu0 0.0
        %923 = vmatpush.msra.mxu0 0.0
        %924 = vmatpush.msra.mxu0 0.0
        %925 = vmatpush.msra.mxu0 0.0
        %926 = vmatpush.msra.mxu0 0.0
        %927 = vmatpush.msra.mxu0 0.0
        %928 = vmatpush.msra.mxu0 0.0
        %929 = vmatpush.msra.mxu0 %v900
        %930 = vmatpush.msra.mxu0 %v899
        %931 = vmatpush.msra.mxu0 %v898
        %932 = vmatpush.msra.mxu0 %v897
        %933 = vmatmul.f32.gmra.mxu0 %v906
        %v934 = vpop.f32.mrf.mxu0
        %v935 = vadd.f32 %v903, %v934
        %936 = vmatmul.f32.gmra.mxu0 %v909
        %v937 = vpop.f32.mrf.mxu0
        %v938 = vadd.f32 %v903, %v937
        %939 = vmatmul.f32.gmra.mxu0 %v912
        %v940 = vpop.f32.mrf.mxu0
        %v941 = vadd.f32 %v903, %v940
        %942 = vmatmul.f32.gmra.mxu0 %v915
        %v943 = vpop.f32.mrf.mxu0
        %v944 = vadd.f32 %v903, %v943
        %945 = vdwg.mxu0
        %vm946 = vcmask 785408
        %947 = vst.msk [vmem:[#allocation3] sm:$0xff] %vm946, %v935
        %948 = vst.msk [vmem:[#allocation3 + $0x8] sm:$0xff] %vm946, %v938
        %949 = vst.msk [vmem:[#allocation3 + $0x10] sm:$0xff] %vm946, %v941
        %950 = vst.msk [vmem:[#allocation3 + $0x18] sm:$0xff] %vm946, %v944
        %v951 = vld [vmem:[#allocation3] sm:$0xff]
        %v952 = vld [vmem:[#allocation3 + $0x8] sm:$0x1]
        %955 = vrot.lane.b32.xlu0 %v951, 96
        %v956 = vpop.permute.xlu0 %955
        %957 = vrot.lane.b32.xlu0 %v952, 96
        %v958 = vpop.permute.xlu0 %957
        %vm959 = vcmask 64512
        %v960 = vsel %vm959, %v951, 0
        %v962 = vsel %vm959, %v952, 0
        %v964 = vsel %vm959, %v956, 0
        %v966 = vsel %vm959, %v958, 0
        %968 = vmatpush.xpose.msra.mxu0 0.0
        %969 = vmatpush.xpose.msra.mxu0 0.0
        %970 = vmatpush.xpose.msra.mxu0 0.0
        %971 = vmatpush.xpose.msra.mxu0 0.0
        %972 = vmatpush.xpose.msra.mxu0 0.0
        %973 = vmatpush.xpose.msra.mxu0 0.0
        %974 = vmatpush.xpose.msra.mxu0 0.0
        %975 = vmatpush.xpose.msra.mxu0 0.0
        %976 = vmatpush.xpose.msra.mxu0 0.0
        %977 = vmatpush.xpose.msra.mxu0 0.0
        %978 = vmatpush.xpose.msra.mxu0 0.0
        %979 = vmatpush.xpose.msra.mxu0 0.0
        %980 = vmatpush.xpose.msra.mxu0 0.0
        %981 = vmatpush.xpose.msra.mxu0 0.0
        %982 = vmatpush.xpose.msra.mxu0 %v966
        %983 = vmatpush.xpose.msra.mxu0 %v964
        %984 = vmatmul.f32.gmra.mxu0 %v960
        %v985 = vpop.f32.mrf.mxu0
        %v986 = vadd.f32 0.0, %v985
        %987 = vmatmul.f32.gmra.mxu0 %v962
        %v988 = vpop.f32.mrf.mxu0
        %v989 = vadd.f32 0.0, %v988
        %990 = vdwg.mxu0
        %v991 = vmul.f32 %v986, 0.35355338
        %v992 = vmul.f32 %v989, 0.35355338
        %vm993 = vcmask 72704
        %v994 = vsel %vm993, %v991, -inf
        %995 = vmax.xlane.f32.xlu0 %v994
        %v996 = vpop.xlane.xlu0 %995
        %vm997 = vcmask 65536
        %v998 = vsel %vm997, %v992, -inf
        %999 = vmax.xlane.f32.xlu0 %v998
        %v1000 = vpop.xlane.xlu0 %999
        %v1001 = vsub.f32 %v991, %v996
        %v1002 = vsub.f32 %v992, %v1000
        %v1003 = vmul.f32 %v1001, 1.442695
        %v1004 = vpow.pop %v1003
        %v1005 = vmul.f32 %v1002, 1.442695
        %v1006 = vpow.pop %v1005
        %v1007 = vsel %vm993, %v1004, 0.0
        %1008 = vadd.xlane.f32.xlu0 %v1007
        %v1009 = vpop.xlane.xlu0 %1008
        %v1010 = vsel %vm997, %v1006, 0.0
        %1011 = vadd.xlane.f32.xlu0 %v1010
        %v1012 = vpop.xlane.xlu0 %1011
        %1013 = vrot.lane.b32.xlu0 %v951, 64
        %v1014 = vpop.permute.xlu0 %1013
        %1015 = vrot.lane.b32.xlu0 %v952, 64
        %v1016 = vpop.permute.xlu0 %1015
        %v1019 = vsel %vm993, %v1004, 0
        %v1022 = vsel %vm993, %v1006, 0
        %vm1024 = vcmask 1040384
        %v1025 = vsel %vm1024, %v1016, 0
        %1027 = vmatpush.msra.mxu0 0.0
        %1028 = vmatpush.msra.mxu0 0.0
        %1029 = vmatpush.msra.mxu0 0.0
        %1030 = vmatpush.msra.mxu0 0.0
        %1031 = vmatpush.msra.mxu0 0.0
        %1032 = vmatpush.msra.mxu0 0.0
        %1033 = vmatpush.msra.mxu0 0.0
        %1034 = vmatpush.msra.mxu0 0.0
        %1035 = vmatpush.msra.mxu0 0.0
        %1036 = vmatpush.msra.mxu0 0.0
        %1037 = vmatpush.msra.mxu0 0.0
        %1038 = vmatpush.msra.mxu0 0.0
        %1039 = vmatpush.msra.mxu0 0.0
        %1040 = vmatpush.msra.mxu0 0.0
        %1041 = vmatpush.msra.mxu0 %v1025
        %1042 = vmatpush.msra.mxu0 %v1014
        %1043 = vmatmul.f32.gmra.mxu0 %v1019
        %v1044 = vpop.f32.mrf.mxu0
        %v1045 = vadd.f32 0.0, %v1044
        %1046 = vmatmul.f32.gmra.mxu0 %v1022
        %v1047 = vpop.f32.mrf.mxu0
        %v1048 = vadd.f32 0.0, %v1047
        %1049 = vdwg.mxu0
        %v1050 = vrcp.pop %v1009
        %v1051 = vrcp.pop %v1012
        %v1052 = vmul.f32 %v1045, %v1050
        %v1053 = vmul.f32 %v1048, %v1051
        %1054 = vst.msk [vmem:[#allocation4] sm:$0xff] %vm959, %v1052
        %vm1055 = vcmask 57344
        %1056 = vst.msk [vmem:[#allocation4 + $0x8] sm:$0x1] %vm1055, %v1053
        %v1057 = vld [vmem:[#allocation3] sm:$0xff]
        %v1058 = vld [vmem:[#allocation3 + $0x8] sm:$0x1]
        %1061 = vrot.lane.b32.xlu0 %v1057, 120
        %v1062 = vpop.permute.xlu0 %1061
        %1063 = vrot.lane.b32.xlu0 %v1058, 120
        %v1064 = vpop.permute.xlu0 %1063
        %1065 = vrot.lane.b32.xlu0 %v1057, 88
        %v1066 = vpop.permute.xlu0 %1065
        %1067 = vrot.lane.b32.xlu0 %v1058, 88
        %v1068 = vpop.permute.xlu0 %1067
        %v1069 = vsel %vm959, %v1062, 0
        %v1071 = vsel %vm959, %v1064, 0
        %v1073 = vsel %vm959, %v1066, 0
        %v1075 = vsel %vm959, %v1068, 0
        %1077 = vmatpush.xpose.msra.mxu0 0.0
        %1078 = vmatpush.xpose.msra.mxu0 0.0
        %1079 = vmatpush.xpose.msra.mxu0 0.0
        %1080 = vmatpush.xpose.msra.mxu0 0.0
        %1081 = vmatpush.xpose.msra.mxu0 0.0
        %1082 = vmatpush.xpose.msra.mxu0 0.0
        %1083 = vmatpush.xpose.msra.mxu0 0.0
        %1084 = vmatpush.xpose.msra.mxu0 0.0
        %1085 = vmatpush.xpose.msra.mxu0 0.0
        %1086 = vmatpush.xpose.msra.mxu0 0.0
        %1087 = vmatpush.xpose.msra.mxu0 0.0
        %1088 = vmatpush.xpose.msra.mxu0 0.0
        %1089 = vmatpush.xpose.msra.mxu0 0.0
        %1090 = vmatpush.xpose.msra.mxu0 0.0
        %1091 = vmatpush.xpose.msra.mxu0 %v1075
        %1092 = vmatpush.xpose.msra.mxu0 %v1073
        %1093 = vmatmul.f32.gmra.mxu0 %v1069
        %v1094 = vpop.f32.mrf.mxu0
        %v1095 = vadd.f32 0.0, %v1094
        %1096 = vmatmul.f32.gmra.mxu0 %v1071
        %v1097 = vpop.f32.mrf.mxu0
        %v1098 = vadd.f32 0.0, %v1097
        %1099 = vdwg.mxu0
        %v1100 = vmul.f32 %v1095, 0.35355338
        %v1101 = vmul.f32 %v1098, 0.35355338
        %v1102 = vsel %vm993, %v1100, -inf
        %1103 = vmax.xlane.f32.xlu0 %v1102
        %v1104 = vpop.xlane.xlu0 %1103
        %v1105 = vsel %vm997, %v1101, -inf
        %1106 = vmax.xlane.f32.xlu0 %v1105
        %v1107 = vpop.xlane.xlu0 %1106
        %v1108 = vsub.f32 %v1100, %v1104
        %v1109 = vsub.f32 %v1101, %v1107
        %v1110 = vmul.f32 %v1108, 1.442695
        %v1111 = vpow.pop %v1110
        %v1112 = vmul.f32 %v1109, 1.442695
        %v1113 = vpow.pop %v1112
        %v1114 = vsel %vm993, %v1111, 0.0
        %1115 = vadd.xlane.f32.xlu0 %v1114
        %v1116 = vpop.xlane.xlu0 %1115
        %v1117 = vsel %vm997, %v1113, 0.0
        %1118 = vadd.xlane.f32.xlu0 %v1117
        %v1119 = vpop.xlane.xlu0 %1118
        %1120 = vrot.lane.b32.xlu0 %v1057, 56
        %v1121 = vpop.permute.xlu0 %1120
        %1122 = vrot.lane.b32.xlu0 %v1058, 56
        %v1123 = vpop.permute.xlu0 %1122
        %v1126 = vsel %vm993, %v1111, 0
        %v1129 = vsel %vm993, %v1113, 0
        %v1131 = vsel %vm1024, %v1123, 0
        %1133 = vmatpush.msra.mxu0 0.0
        %1134 = vmatpush.msra.mxu0 0.0
        %1135 = vmatpush.msra.mxu0 0.0
        %1136 = vmatpush.msra.mxu0 0.0
        %1137 = vmatpush.msra.mxu0 0.0
        %1138 = vmatpush.msra.mxu0 0.0
        %1139 = vmatpush.msra.mxu0 0.0
        %1140 = vmatpush.msra.mxu0 0.0
        %1141 = vmatpush.msra.mxu0 0.0
        %1142 = vmatpush.msra.mxu0 0.0
        %1143 = vmatpush.msra.mxu0 0.0
        %1144 = vmatpush.msra.mxu0 0.0
        %1145 = vmatpush.msra.mxu0 0.0
        %1146 = vmatpush.msra.mxu0 0.0
        %1147 = vmatpush.msra.mxu0 %v1131
        %1148 = vmatpush.msra.mxu0 %v1121
        %1149 = vmatmul.f32.gmra.mxu0 %v1126
        %v1150 = vpop.f32.mrf.mxu0
        %v1151 = vadd.f32 0.0, %v1150
        %1152 = vmatmul.f32.gmra.mxu0 %v1129
        %v1153 = vpop.f32.mrf.mxu0
        %v1154 = vadd.f32 0.0, %v1153
        %1155 = vdwg.mxu0
        %v1156 = vrcp.pop %v1116
        %v1157 = vrcp.pop %v1119
        %v1158 = vmul.f32 %v1151, %v1156
        %v1159 = vmul.f32 %v1154, %v1157
        %1162 = vrot.lane.b32.xlu0 %v1158, 8
        %v1163 = vpop.permute.xlu0 %1162
        %1164 = vrot.lane.b32.xlu0 %v1159, 8
        %v1165 = vpop.permute.xlu0 %1164
        %vm1168 = vcmask 130112
        %1169 = vst.msk [vmem:[#allocation4] sm:$0xff] %vm1168, %v1163
        %vm1170 = vcmask 122944
        %1171 = vst.msk [vmem:[#allocation4 + $0x8] sm:$0x1] %vm1170, %v1165
        %v1172 = vld [vmem:[#allocation3] sm:$0xff]
        %v1173 = vld [vmem:[#allocation3 + $0x8] sm:$0x1]
        %1176 = vrot.lane.b32.xlu0 %v1172, 112
        %v1177 = vpop.permute.xlu0 %1176
        %1178 = vrot.lane.b32.xlu0 %v1173, 112
        %v1179 = vpop.permute.xlu0 %1178
        %1180 = vrot.lane.b32.xlu0 %v1172, 80
        %v1181 = vpop.permute.xlu0 %1180
        %1182 = vrot.lane.b32.xlu0 %v1173, 80
        %v1183 = vpop.permute.xlu0 %1182
        %v1184 = vsel %vm959, %v1177, 0
        %v1186 = vsel %vm959, %v1179, 0
        %v1188 = vsel %vm959, %v1181, 0
        %v1190 = vsel %vm959, %v1183, 0
        %1192 = vmatpush.xpose.msra.mxu0 0.0
        %1193 = vmatpush.xpose.msra.mxu0 0.0
        %1194 = vmatpush.xpose.msra.mxu0 0.0
        %1195 = vmatpush.xpose.msra.mxu0 0.0
        %1196 = vmatpush.xpose.msra.mxu0 0.0
        %1197 = vmatpush.xpose.msra.mxu0 0.0
        %1198 = vmatpush.xpose.msra.mxu0 0.0
        %1199 = vmatpush.xpose.msra.mxu0 0.0
        %1200 = vmatpush.xpose.msra.mxu0 0.0
        %1201 = vmatpush.xpose.msra.mxu0 0.0
        %1202 = vmatpush.xpose.msra.mxu0 0.0
        %1203 = vmatpush.xpose.msra.mxu0 0.0
        %1204 = vmatpush.xpose.msra.mxu0 0.0
        %1205 = vmatpush.xpose.msra.mxu0 0.0
        %1206 = vmatpush.xpose.msra.mxu0 %v1190
        %1207 = vmatpush.xpose.msra.mxu0 %v1188
        %1208 = vmatmul.f32.gmra.mxu0 %v1184
        %v1209 = vpop.f32.mrf.mxu0
        %v1210 = vadd.f32 0.0, %v1209
        %1211 = vmatmul.f32.gmra.mxu0 %v1186
        %v1212 = vpop.f32.mrf.mxu0
        %v1213 = vadd.f32 0.0, %v1212
        %1214 = vdwg.mxu0
        %v1215 = vmul.f32 %v1210, 0.35355338
        %v1216 = vmul.f32 %v1213, 0.35355338
        %v1217 = vsel %vm993, %v1215, -inf
        %1218 = vmax.xlane.f32.xlu0 %v1217
        %v1219 = vpop.xlane.xlu0 %1218
        %v1220 = vsel %vm997, %v1216, -inf
        %1221 = vmax.xlane.f32.xlu0 %v1220
        %v1222 = vpop.xlane.xlu0 %1221
        %v1223 = vsub.f32 %v1215, %v1219
        %v1224 = vsub.f32 %v1216, %v1222
        %v1225 = vmul.f32 %v1223, 1.442695
        %v1226 = vpow.pop %v1225
        %v1227 = vmul.f32 %v1224, 1.442695
        %v1228 = vpow.pop %v1227
        %v1229 = vsel %vm993, %v1226, 0.0
        %1230 = vadd.xlane.f32.xlu0 %v1229
        %v1231 = vpop.xlane.xlu0 %1230
        %v1232 = vsel %vm997, %v1228, 0.0
        %1233 = vadd.xlane.f32.xlu0 %v1232
        %v1234 = vpop.xlane.xlu0 %1233
        %1235 = vrot.lane.b32.xlu0 %v1172, 48
        %v1236 = vpop.permute.xlu0 %1235
        %1237 = vrot.lane.b32.xlu0 %v1173, 48
        %v1238 = vpop.permute.xlu0 %1237
        %v1241 = vsel %vm993, %v1226, 0
        %v1244 = vsel %vm993, %v1228, 0
        %v1246 = vsel %vm1024, %v1238, 0
        %1248 = vmatpush.msra.mxu0 0.0
        %1249 = vmatpush.msra.mxu0 0.0
        %1250 = vmatpush.msra.mxu0 0.0
        %1251 = vmatpush.msra.mxu0 0.0
        %1252 = vmatpush.msra.mxu0 0.0
        %1253 = vmatpush.msra.mxu0 0.0
        %1254 = vmatpush.msra.mxu0 0.0
        %1255 = vmatpush.msra.mxu0 0.0
        %1256 = vmatpush.msra.mxu0 0.0
        %1257 = vmatpush.msra.mxu0 0.0
        %1258 = vmatpush.msra.mxu0 0.0
        %1259 = vmatpush.msra.mxu0 0.0
        %1260 = vmatpush.msra.mxu0 0.0
        %1261 = vmatpush.msra.mxu0 0.0
        %1262 = vmatpush.msra.mxu0 %v1246
        %1263 = vmatpush.msra.mxu0 %v1236
        %1264 = vmatmul.f32.gmra.mxu0 %v1241
        %v1265 = vpop.f32.mrf.mxu0
        %v1266 = vadd.f32 0.0, %v1265
        %1267 = vmatmul.f32.gmra.mxu0 %v1244
        %v1268 = vpop.f32.mrf.mxu0
        %v1269 = vadd.f32 0.0, %v1268
        %1270 = vdwg.mxu0
        %v1271 = vrcp.pop %v1231
        %v1272 = vrcp.pop %v1234
        %v1273 = vmul.f32 %v1266, %v1271
        %v1274 = vmul.f32 %v1269, %v1272
        %1277 = vrot.lane.b32.xlu0 %v1273, 16
        %v1278 = vpop.permute.xlu0 %1277
        %1279 = vrot.lane.b32.xlu0 %v1274, 16
        %v1280 = vpop.permute.xlu0 %1279
        %vm1283 = vcmask 195712
        %1284 = vst.msk [vmem:[#allocation4] sm:$0xff] %vm1283, %v1278
        %vm1285 = vcmask 188544
        %1286 = vst.msk [vmem:[#allocation4 + $0x8] sm:$0x1] %vm1285, %v1280
        %v1287 = vld [vmem:[#allocation3] sm:$0xff]
        %v1288 = vld [vmem:[#allocation3 + $0x8] sm:$0x1]
        %1291 = vrot.lane.b32.xlu0 %v1287, 104
        %v1292 = vpop.permute.xlu0 %1291
        %1293 = vrot.lane.b32.xlu0 %v1288, 104
        %v1294 = vpop.permute.xlu0 %1293
        %1295 = vrot.lane.b32.xlu0 %v1287, 72
        %v1296 = vpop.permute.xlu0 %1295
        %1297 = vrot.lane.b32.xlu0 %v1288, 72
        %v1298 = vpop.permute.xlu0 %1297
        %v1299 = vsel %vm959, %v1292, 0
        %v1301 = vsel %vm959, %v1294, 0
        %v1303 = vsel %vm959, %v1296, 0
        %v1305 = vsel %vm959, %v1298, 0
        %1307 = vmatpush.xpose.msra.mxu0 0.0
        %1308 = vmatpush.xpose.msra.mxu0 0.0
        %1309 = vmatpush.xpose.msra.mxu0 0.0
        %1310 = vmatpush.xpose.msra.mxu0 0.0
        %1311 = vmatpush.xpose.msra.mxu0 0.0
        %1312 = vmatpush.xpose.msra.mxu0 0.0
        %1313 = vmatpush.xpose.msra.mxu0 0.0
        %1314 = vmatpush.xpose.msra.mxu0 0.0
        %1315 = vmatpush.xpose.msra.mxu0 0.0
        %1316 = vmatpush.xpose.msra.mxu0 0.0
        %1317 = vmatpush.xpose.msra.mxu0 0.0
        %1318 = vmatpush.xpose.msra.mxu0 0.0
        %1319 = vmatpush.xpose.msra.mxu0 0.0
        %1320 = vmatpush.xpose.msra.mxu0 0.0
        %1321 = vmatpush.xpose.msra.mxu0 %v1305
        %1322 = vmatpush.xpose.msra.mxu0 %v1303
        %1323 = vmatmul.f32.gmra.mxu0 %v1299
        %v1324 = vpop.f32.mrf.mxu0
        %v1325 = vadd.f32 0.0, %v1324
        %1326 = vmatmul.f32.gmra.mxu0 %v1301
        %v1327 = vpop.f32.mrf.mxu0
        %v1328 = vadd.f32 0.0, %v1327
        %1329 = vdwg.mxu0
        %v1330 = vmul.f32 %v1325, 0.35355338
        %v1331 = vmul.f32 %v1328, 0.35355338
        %v1332 = vsel %vm993, %v1330, -inf
        %1333 = vmax.xlane.f32.xlu0 %v1332
        %v1334 = vpop.xlane.xlu0 %1333
        %v1335 = vsel %vm997, %v1331, -inf
        %1336 = vmax.xlane.f32.xlu0 %v1335
        %v1337 = vpop.xlane.xlu0 %1336
        %v1338 = vsub.f32 %v1330, %v1334
        %v1339 = vsub.f32 %v1331, %v1337
        %v1340 = vmul.f32 %v1338, 1.442695
        %v1341 = vpow.pop %v1340
        %v1342 = vmul.f32 %v1339, 1.442695
        %v1343 = vpow.pop %v1342
        %v1344 = vsel %vm993, %v1341, 0.0
        %1345 = vadd.xlane.f32.xlu0 %v1344
        %v1346 = vpop.xlane.xlu0 %1345
        %v1347 = vsel %vm997, %v1343, 0.0
        %1348 = vadd.xlane.f32.xlu0 %v1347
        %v1349 = vpop.xlane.xlu0 %1348
        %1350 = vrot.lane.b32.xlu0 %v1287, 40
        %v1351 = vpop.permute.xlu0 %1350
        %1352 = vrot.lane.b32.xlu0 %v1288, 40
        %v1353 = vpop.permute.xlu0 %1352
        %v1356 = vsel %vm993, %v1341, 0
        %v1359 = vsel %vm993, %v1343, 0
        %v1361 = vsel %vm1024, %v1353, 0
        %1363 = vmatpush.msra.mxu0 0.0
        %1364 = vmatpush.msra.mxu0 0.0
        %1365 = vmatpush.msra.mxu0 0.0
        %1366 = vmatpush.msra.mxu0 0.0
        %1367 = vmatpush.msra.mxu0 0.0
        %1368 = vmatpush.msra.mxu0 0.0
        %1369 = vmatpush.msra.mxu0 0.0
        %1370 = vmatpush.msra.mxu0 0.0
        %1371 = vmatpush.msra.mxu0 0.0
        %1372 = vmatpush.msra.mxu0 0.0
        %1373 = vmatpush.msra.mxu0 0.0
        %1374 = vmatpush.msra.mxu0 0.0
        %1375 = vmatpush.msra.mxu0 0.0
        %1376 = vmatpush.msra.mxu0 0.0
        %1377 = vmatpush.msra.mxu0 %v1361
        %1378 = vmatpush.msra.mxu0 %v1351
        %1379 = vmatmul.f32.gmra.mxu0 %v1356
        %v1380 = vpop.f32.mrf.mxu0
        %v1381 = vadd.f32 0.0, %v1380
        %1382 = vmatmul.f32.gmra.mxu0 %v1359
        %v1383 = vpop.f32.mrf.mxu0
        %v1384 = vadd.f32 0.0, %v1383
        %1385 = vdwg.mxu0
        %v1386 = vrcp.pop %v1346
        %v1387 = vrcp.pop %v1349
        %v1388 = vmul.f32 %v1381, %v1386
        %v1389 = vmul.f32 %v1384, %v1387
        %1392 = vrot.lane.b32.xlu0 %v1388, 24
        %v1393 = vpop.permute.xlu0 %1392
        %1394 = vrot.lane.b32.xlu0 %v1389, 24
        %v1395 = vpop.permute.xlu0 %1394
        %vm1398 = vcmask 261312
        %1399 = vst.msk [vmem:[#allocation4] sm:$0xff] %vm1398, %v1393
        %vm1400 = vcmask 254144
        %1401 = vst.msk [vmem:[#allocation4 + $0x8] sm:$0x1] %vm1400, %v1395
        %v1402 = vld [vmem:[#allocation3 + $0x10] sm:$0xff]
        %v1403 = vld [vmem:[#allocation3 + $0x18] sm:$0x1]
        %1406 = vrot.lane.b32.xlu0 %v1402, 96
        %v1407 = vpop.permute.xlu0 %1406
        %1408 = vrot.lane.b32.xlu0 %v1403, 96
        %v1409 = vpop.permute.xlu0 %1408
        %v1410 = vsel %vm959, %v1402, 0
        %v1412 = vsel %vm959, %v1403, 0
        %v1414 = vsel %vm959, %v1407, 0
        %v1416 = vsel %vm959, %v1409, 0
        %1418 = vmatpush.xpose.msra.mxu0 0.0
        %1419 = vmatpush.xpose.msra.mxu0 0.0
        %1420 = vmatpush.xpose.msra.mxu0 0.0
        %1421 = vmatpush.xpose.msra.mxu0 0.0
        %1422 = vmatpush.xpose.msra.mxu0 0.0
        %1423 = vmatpush.xpose.msra.mxu0 0.0
        %1424 = vmatpush.xpose.msra.mxu0 0.0
        %1425 = vmatpush.xpose.msra.mxu0 0.0
        %1426 = vmatpush.xpose.msra.mxu0 0.0
        %1427 = vmatpush.xpose.msra.mxu0 0.0
        %1428 = vmatpush.xpose.msra.mxu0 0.0
        %1429 = vmatpush.xpose.msra.mxu0 0.0
        %1430 = vmatpush.xpose.msra.mxu0 0.0
        %1431 = vmatpush.xpose.msra.mxu0 0.0
        %1432 = vmatpush.xpose.msra.mxu0 %v1416
        %1433 = vmatpush.xpose.msra.mxu0 %v1414
        %1434 = vmatmul.f32.gmra.mxu0 %v1410
        %v1435 = vpop.f32.mrf.mxu0
        %v1436 = vadd.f32 0.0, %v1435
        %1437 = vmatmul.f32.gmra.mxu0 %v1412
        %v1438 = vpop.f32.mrf.mxu0
        %v1439 = vadd.f32 0.0, %v1438
        %1440 = vdwg.mxu0
        %v1441 = vmul.f32 %v1436, 0.35355338
        %v1442 = vmul.f32 %v1439, 0.35355338
        %v1443 = vsel %vm993, %v1441, -inf
        %1444 = vmax.xlane.f32.xlu0 %v1443
        %v1445 = vpop.xlane.xlu0 %1444
        %v1446 = vsel %vm997, %v1442, -inf
        %1447 = vmax.xlane.f32.xlu0 %v1446
        %v1448 = vpop.xlane.xlu0 %1447
        %v1449 = vsub.f32 %v1441, %v1445
        %v1450 = vsub.f32 %v1442, %v1448
        %v1451 = vmul.f32 %v1449, 1.442695
        %v1452 = vpow.pop %v1451
        %v1453 = vmul.f32 %v1450, 1.442695
        %v1454 = vpow.pop %v1453
        %v1455 = vsel %vm993, %v1452, 0.0
        %1456 = vadd.xlane.f32.xlu0 %v1455
        %v1457 = vpop.xlane.xlu0 %1456
        %v1458 = vsel %vm997, %v1454, 0.0
        %1459 = vadd.xlane.f32.xlu0 %v1458
        %v1460 = vpop.xlane.xlu0 %1459
        %1461 = vrot.lane.b32.xlu0 %v1402, 64
        %v1462 = vpop.permute.xlu0 %1461
        %1463 = vrot.lane.b32.xlu0 %v1403, 64
        %v1464 = vpop.permute.xlu0 %1463
        %v1467 = vsel %vm993, %v1452, 0
        %v1470 = vsel %vm993, %v1454, 0
        %v1472 = vsel %vm1024, %v1464, 0
        %1474 = vmatpush.msra.mxu0 0.0
        %1475 = vmatpush.msra.mxu0 0.0
        %1476 = vmatpush.msra.mxu0 0.0
        %1477 = vmatpush.msra.mxu0 0.0
        %1478 = vmatpush.msra.mxu0 0.0
        %1479 = vmatpush.msra.mxu0 0.0
        %1480 = vmatpush.msra.mxu0 0.0
        %1481 = vmatpush.msra.mxu0 0.0
        %1482 = vmatpush.msra.mxu0 0.0
        %1483 = vmatpush.msra.mxu0 0.0
        %1484 = vmatpush.msra.mxu0 0.0
        %1485 = vmatpush.msra.mxu0 0.0
        %1486 = vmatpush.msra.mxu0 0.0
        %1487 = vmatpush.msra.mxu0 0.0
        %1488 = vmatpush.msra.mxu0 %v1472
        %1489 = vmatpush.msra.mxu0 %v1462
        %1490 = vmatmul.f32.gmra.mxu0 %v1467
        %v1491 = vpop.f32.mrf.mxu0
        %v1492 = vadd.f32 0.0, %v1491
        %1493 = vmatmul.f32.gmra.mxu0 %v1470
        %v1494 = vpop.f32.mrf.mxu0
        %v1495 = vadd.f32 0.0, %v1494
        %1496 = vdwg.mxu0
        %v1497 = vrcp.pop %v1457
        %v1498 = vrcp.pop %v1460
        %v1499 = vmul.f32 %v1492, %v1497
        %v1500 = vmul.f32 %v1495, %v1498
        %1501 = vst.msk [vmem:[#allocation4 + $0x10] sm:$0xff] %vm959, %v1499
        %1502 = vst.msk [vmem:[#allocation4 + $0x18] sm:$0x1] %vm1055, %v1500
        %v1503 = vld [vmem:[#allocation3 + $0x10] sm:$0xff]
        %v1504 = vld [vmem:[#allocation3 + $0x18] sm:$0x1]
        %1507 = vrot.lane.b32.xlu0 %v1503, 120
        %v1508 = vpop.permute.xlu0 %1507
        %1509 = vrot.lane.b32.xlu0 %v1504, 120
        %v1510 = vpop.permute.xlu0 %1509
        %1511 = vrot.lane.b32.xlu0 %v1503, 88
        %v1512 = vpop.permute.xlu0 %1511
        %1513 = vrot.lane.b32.xlu0 %v1504, 88
        %v1514 = vpop.permute.xlu0 %1513
        %v1515 = vsel %vm959, %v1508, 0
        %v1517 = vsel %vm959, %v1510, 0
        %v1519 = vsel %vm959, %v1512, 0
        %v1521 = vsel %vm959, %v1514, 0
        %1523 = vmatpush.xpose.msra.mxu0 0.0
        %1524 = vmatpush.xpose.msra.mxu0 0.0
        %1525 = vmatpush.xpose.msra.mxu0 0.0
        %1526 = vmatpush.xpose.msra.mxu0 0.0
        %1527 = vmatpush.xpose.msra.mxu0 0.0
        %1528 = vmatpush.xpose.msra.mxu0 0.0
        %1529 = vmatpush.xpose.msra.mxu0 0.0
        %1530 = vmatpush.xpose.msra.mxu0 0.0
        %1531 = vmatpush.xpose.msra.mxu0 0.0
        %1532 = vmatpush.xpose.msra.mxu0 0.0
        %1533 = vmatpush.xpose.msra.mxu0 0.0
        %1534 = vmatpush.xpose.msra.mxu0 0.0
        %1535 = vmatpush.xpose.msra.mxu0 0.0
        %1536 = vmatpush.xpose.msra.mxu0 0.0
        %1537 = vmatpush.xpose.msra.mxu0 %v1521
        %1538 = vmatpush.xpose.msra.mxu0 %v1519
        %1539 = vmatmul.f32.gmra.mxu0 %v1515
        %v1540 = vpop.f32.mrf.mxu0
        %v1541 = vadd.f32 0.0, %v1540
        %1542 = vmatmul.f32.gmra.mxu0 %v1517
        %v1543 = vpop.f32.mrf.mxu0
        %v1544 = vadd.f32 0.0, %v1543
        %1545 = vdwg.mxu0
        %v1546 = vmul.f32 %v1541, 0.35355338
        %v1547 = vmul.f32 %v1544, 0.35355338
        %v1548 = vsel %vm993, %v1546, -inf
        %1549 = vmax.xlane.f32.xlu0 %v1548
        %v1550 = vpop.xlane.xlu0 %1549
        %v1551 = vsel %vm997, %v1547, -inf
        %1552 = vmax.xlane.f32.xlu0 %v1551
        %v1553 = vpop.xlane.xlu0 %1552
        %v1554 = vsub.f32 %v1546, %v1550
        %v1555 = vsub.f32 %v1547, %v1553
        %v1556 = vmul.f32 %v1554, 1.442695
        %v1557 = vpow.pop %v1556
        %v1558 = vmul.f32 %v1555, 1.442695
        %v1559 = vpow.pop %v1558
        %v1560 = vsel %vm993, %v1557, 0.0
        %1561 = vadd.xlane.f32.xlu0 %v1560
        %v1562 = vpop.xlane.xlu0 %1561
        %v1563 = vsel %vm997, %v1559, 0.0
        %1564 = vadd.xlane.f32.xlu0 %v1563
        %v1565 = vpop.xlane.xlu0 %1564
        %1566 = vrot.lane.b32.xlu0 %v1503, 56
        %v1567 = vpop.permute.xlu0 %1566
        %1568 = vrot.lane.b32.xlu0 %v1504, 56
        %v1569 = vpop.permute.xlu0 %1568
        %v1572 = vsel %vm993, %v1557, 0
        %v1575 = vsel %vm993, %v1559, 0
        %v1577 = vsel %vm1024, %v1569, 0
        %1579 = vmatpush.msra.mxu0 0.0
        %1580 = vmatpush.msra.mxu0 0.0
        %1581 = vmatpush.msra.mxu0 0.0
        %1582 = vmatpush.msra.mxu0 0.0
        %1583 = vmatpush.msra.mxu0 0.0
        %1584 = vmatpush.msra.mxu0 0.0
        %1585 = vmatpush.msra.mxu0 0.0
        %1586 = vmatpush.msra.mxu0 0.0
        %1587 = vmatpush.msra.mxu0 0.0
        %1588 = vmatpush.msra.mxu0 0.0
        %1589 = vmatpush.msra.mxu0 0.0
        %1590 = vmatpush.msra.mxu0 0.0
        %1591 = vmatpush.msra.mxu0 0.0
        %1592 = vmatpush.msra.mxu0 0.0
        %1593 = vmatpush.msra.mxu0 %v1577
        %1594 = vmatpush.msra.mxu0 %v1567
        %1595 = vmatmul.f32.gmra.mxu0 %v1572
        %v1596 = vpop.f32.mrf.mxu0
        %v1597 = vadd.f32 0.0, %v1596
        %1598 = vmatmul.f32.gmra.mxu0 %v1575
        %v1599 = vpop.f32.mrf.mxu0
        %v1600 = vadd.f32 0.0, %v1599
        %1601 = vdwg.mxu0
        %v1602 = vrcp.pop %v1562
        %v1603 = vrcp.pop %v1565
        %v1604 = vmul.f32 %v1597, %v1602
        %v1605 = vmul.f32 %v1600, %v1603
        %1608 = vrot.lane.b32.xlu0 %v1604, 8
        %v1609 = vpop.permute.xlu0 %1608
        %1610 = vrot.lane.b32.xlu0 %v1605, 8
        %v1611 = vpop.permute.xlu0 %1610
        %1614 = vst.msk [vmem:[#allocation4 + $0x10] sm:$0xff] %vm1168, %v1609
        %1615 = vst.msk [vmem:[#allocation4 + $0x18] sm:$0x1] %vm1170, %v1611
        %v1616 = vld [vmem:[#allocation3 + $0x10] sm:$0xff]
        %v1617 = vld [vmem:[#allocation3 + $0x18] sm:$0x1]
        %1620 = vrot.lane.b32.xlu0 %v1616, 112
        %v1621 = vpop.permute.xlu0 %1620
        %1622 = vrot.lane.b32.xlu0 %v1617, 112
        %v1623 = vpop.permute.xlu0 %1622
        %1624 = vrot.lane.b32.xlu0 %v1616, 80
        %v1625 = vpop.permute.xlu0 %1624
        %1626 = vrot.lane.b32.xlu0 %v1617, 80
        %v1627 = vpop.permute.xlu0 %1626
        %v1628 = vsel %vm959, %v1621, 0
        %v1630 = vsel %vm959, %v1623, 0
        %v1632 = vsel %vm959, %v1625, 0
        %v1634 = vsel %vm959, %v1627, 0
        %1636 = vmatpush.xpose.msra.mxu0 0.0
        %1637 = vmatpush.xpose.msra.mxu0 0.0
        %1638 = vmatpush.xpose.msra.mxu0 0.0
        %1639 = vmatpush.xpose.msra.mxu0 0.0
        %1640 = vmatpush.xpose.msra.mxu0 0.0
        %1641 = vmatpush.xpose.msra.mxu0 0.0
        %1642 = vmatpush.xpose.msra.mxu0 0.0
        %1643 = vmatpush.xpose.msra.mxu0 0.0
        %1644 = vmatpush.xpose.msra.mxu0 0.0
        %1645 = vmatpush.xpose.msra.mxu0 0.0
        %1646 = vmatpush.xpose.msra.mxu0 0.0
        %1647 = vmatpush.xpose.msra.mxu0 0.0
        %1648 = vmatpush.xpose.msra.mxu0 0.0
        %1649 = vmatpush.xpose.msra.mxu0 0.0
        %1650 = vmatpush.xpose.msra.mxu0 %v1634
        %1651 = vmatpush.xpose.msra.mxu0 %v1632
        %1652 = vmatmul.f32.gmra.mxu0 %v1628
        %v1653 = vpop.f32.mrf.mxu0
        %v1654 = vadd.f32 0.0, %v1653
        %1655 = vmatmul.f32.gmra.mxu0 %v1630
        %v1656 = vpop.f32.mrf.mxu0
        %v1657 = vadd.f32 0.0, %v1656
        %1658 = vdwg.mxu0
        %v1659 = vmul.f32 %v1654, 0.35355338
        %v1660 = vmul.f32 %v1657, 0.35355338
        %v1661 = vsel %vm993, %v1659, -inf
        %1662 = vmax.xlane.f32.xlu0 %v1661
        %v1663 = vpop.xlane.xlu0 %1662
        %v1664 = vsel %vm997, %v1660, -inf
        %1665 = vmax.xlane.f32.xlu0 %v1664
        %v1666 = vpop.xlane.xlu0 %1665
        %v1667 = vsub.f32 %v1659, %v1663
        %v1668 = vsub.f32 %v1660, %v1666
        %v1669 = vmul.f32 %v1667, 1.442695
        %v1670 = vpow.pop %v1669
        %v1671 = vmul.f32 %v1668, 1.442695
        %v1672 = vpow.pop %v1671
        %v1673 = vsel %vm993, %v1670, 0.0
        %1674 = vadd.xlane.f32.xlu0 %v1673
        %v1675 = vpop.xlane.xlu0 %1674
        %v1676 = vsel %vm997, %v1672, 0.0
        %1677 = vadd.xlane.f32.xlu0 %v1676
        %v1678 = vpop.xlane.xlu0 %1677
        %1679 = vrot.lane.b32.xlu0 %v1616, 48
        %v1680 = vpop.permute.xlu0 %1679
        %1681 = vrot.lane.b32.xlu0 %v1617, 48
        %v1682 = vpop.permute.xlu0 %1681
        %v1685 = vsel %vm993, %v1670, 0
        %v1688 = vsel %vm993, %v1672, 0
        %v1690 = vsel %vm1024, %v1682, 0
        %1692 = vmatpush.msra.mxu0 0.0
        %1693 = vmatpush.msra.mxu0 0.0
        %1694 = vmatpush.msra.mxu0 0.0
        %1695 = vmatpush.msra.mxu0 0.0
        %1696 = vmatpush.msra.mxu0 0.0
        %1697 = vmatpush.msra.mxu0 0.0
        %1698 = vmatpush.msra.mxu0 0.0
        %1699 = vmatpush.msra.mxu0 0.0
        %1700 = vmatpush.msra.mxu0 0.0
        %1701 = vmatpush.msra.mxu0 0.0
        %1702 = vmatpush.msra.mxu0 0.0
        %1703 = vmatpush.msra.mxu0 0.0
        %1704 = vmatpush.msra.mxu0 0.0
        %1705 = vmatpush.msra.mxu0 0.0
        %1706 = vmatpush.msra.mxu0 %v1690
        %1707 = vmatpush.msra.mxu0 %v1680
        %1708 = vmatmul.f32.gmra.mxu0 %v1685
        %v1709 = vpop.f32.mrf.mxu0
        %v1710 = vadd.f32 0.0, %v1709
        %1711 = vmatmul.f32.gmra.mxu0 %v1688
        %v1712 = vpop.f32.mrf.mxu0
        %v1713 = vadd.f32 0.0, %v1712
        %1714 = vdwg.mxu0
        %v1715 = vrcp.pop %v1675
        %v1716 = vrcp.pop %v1678
        %v1717 = vmul.f32 %v1710, %v1715
        %v1718 = vmul.f32 %v1713, %v1716
        %1721 = vrot.lane.b32.xlu0 %v1717, 16
        %v1722 = vpop.permute.xlu0 %1721
        %1723 = vrot.lane.b32.xlu0 %v1718, 16
        %v1724 = vpop.permute.xlu0 %1723
        %1727 = vst.msk [vmem:[#allocation4 + $0x10] sm:$0xff] %vm1283, %v1722
        %1728 = vst.msk [vmem:[#allocation4 + $0x18] sm:$0x1] %vm1285, %v1724
        %v1729 = vld [vmem:[#allocation3 + $0x10] sm:$0xff]
        %v1730 = vld [vmem:[#allocation3 + $0x18] sm:$0x1]
        %1733 = vrot.lane.b32.xlu0 %v1729, 104
        %v1734 = vpop.permute.xlu0 %1733
        %1735 = vrot.lane.b32.xlu0 %v1730, 104
        %v1736 = vpop.permute.xlu0 %1735
        %1737 = vrot.lane.b32.xlu0 %v1729, 72
        %v1738 = vpop.permute.xlu0 %1737
        %1739 = vrot.lane.b32.xlu0 %v1730, 72
        %v1740 = vpop.permute.xlu0 %1739
        %v1741 = vsel %vm959, %v1734, 0
        %v1743 = vsel %vm959, %v1736, 0
        %v1745 = vsel %vm959, %v1738, 0
        %v1747 = vsel %vm959, %v1740, 0
        %1749 = vmatpush.xpose.msra.mxu0 0.0
        %1750 = vmatpush.xpose.msra.mxu0 0.0
        %1751 = vmatpush.xpose.msra.mxu0 0.0
        %1752 = vmatpush.xpose.msra.mxu0 0.0
        %1753 = vmatpush.xpose.msra.mxu0 0.0
        %1754 = vmatpush.xpose.msra.mxu0 0.0
        %1755 = vmatpush.xpose.msra.mxu0 0.0
        %1756 = vmatpush.xpose.msra.mxu0 0.0
        %1757 = vmatpush.xpose.msra.mxu0 0.0
        %1758 = vmatpush.xpose.msra.mxu0 0.0
        %1759 = vmatpush.xpose.msra.mxu0 0.0
        %1760 = vmatpush.xpose.msra.mxu0 0.0
        %1761 = vmatpush.xpose.msra.mxu0 0.0
        %1762 = vmatpush.xpose.msra.mxu0 0.0
        %1763 = vmatpush.xpose.msra.mxu0 %v1747
        %1764 = vmatpush.xpose.msra.mxu0 %v1745
        %1765 = vmatmul.f32.gmra.mxu0 %v1741
        %v1766 = vpop.f32.mrf.mxu0
        %v1767 = vadd.f32 0.0, %v1766
        %1768 = vmatmul.f32.gmra.mxu0 %v1743
        %v1769 = vpop.f32.mrf.mxu0
        %v1770 = vadd.f32 0.0, %v1769
        %1771 = vdwg.mxu0
        %v1772 = vmul.f32 %v1767, 0.35355338
        %v1773 = vmul.f32 %v1770, 0.35355338
        %v1774 = vsel %vm993, %v1772, -inf
        %1775 = vmax.xlane.f32.xlu0 %v1774
        %v1776 = vpop.xlane.xlu0 %1775
        %v1777 = vsel %vm997, %v1773, -inf
        %1778 = vmax.xlane.f32.xlu0 %v1777
        %v1779 = vpop.xlane.xlu0 %1778
        %v1780 = vsub.f32 %v1772, %v1776
        %v1781 = vsub.f32 %v1773, %v1779
        %v1782 = vmul.f32 %v1780, 1.442695
        %v1783 = vpow.pop %v1782
        %v1784 = vmul.f32 %v1781, 1.442695
        %v1785 = vpow.pop %v1784
        %v1786 = vsel %vm993, %v1783, 0.0
        %1787 = vadd.xlane.f32.xlu0 %v1786
        %v1788 = vpop.xlane.xlu0 %1787
        %v1789 = vsel %vm997, %v1785, 0.0
        %1790 = vadd.xlane.f32.xlu0 %v1789
        %v1791 = vpop.xlane.xlu0 %1790
        %1792 = vrot.lane.b32.xlu0 %v1729, 40
        %v1793 = vpop.permute.xlu0 %1792
        %1794 = vrot.lane.b32.xlu0 %v1730, 40
        %v1795 = vpop.permute.xlu0 %1794
        %v1798 = vsel %vm993, %v1783, 0
        %v1801 = vsel %vm993, %v1785, 0
        %v1803 = vsel %vm1024, %v1795, 0
        %1805 = vmatpush.msra.mxu0 0.0
        %1806 = vmatpush.msra.mxu0 0.0
        %1807 = vmatpush.msra.mxu0 0.0
        %1808 = vmatpush.msra.mxu0 0.0
        %1809 = vmatpush.msra.mxu0 0.0
        %1810 = vmatpush.msra.mxu0 0.0
        %1811 = vmatpush.msra.mxu0 0.0
        %1812 = vmatpush.msra.mxu0 0.0
        %1813 = vmatpush.msra.mxu0 0.0
        %1814 = vmatpush.msra.mxu0 0.0
        %1815 = vmatpush.msra.mxu0 0.0
        %1816 = vmatpush.msra.mxu0 0.0
        %1817 = vmatpush.msra.mxu0 0.0
        %1818 = vmatpush.msra.mxu0 0.0
        %1819 = vmatpush.msra.mxu0 %v1803
        %1820 = vmatpush.msra.mxu0 %v1793
        %1821 = vmatmul.f32.gmra.mxu0 %v1798
        %v1822 = vpop.f32.mrf.mxu0
        %v1823 = vadd.f32 0.0, %v1822
        %1824 = vmatmul.f32.gmra.mxu0 %v1801
        %v1825 = vpop.f32.mrf.mxu0
        %v1826 = vadd.f32 0.0, %v1825
        %1827 = vdwg.mxu0
        %v1828 = vrcp.pop %v1788
        %v1829 = vrcp.pop %v1791
        %v1830 = vmul.f32 %v1823, %v1828
        %v1831 = vmul.f32 %v1826, %v1829
        %1834 = vrot.lane.b32.xlu0 %v1830, 24
        %v1835 = vpop.permute.xlu0 %1834
        %1836 = vrot.lane.b32.xlu0 %v1831, 24
        %v1837 = vpop.permute.xlu0 %1836
        %1840 = vst.msk [vmem:[#allocation4 + $0x10] sm:$0xff] %vm1398, %v1835
        %1841 = vst.msk [vmem:[#allocation4 + $0x18] sm:$0x1] %vm1400, %v1837
        %v1842 = vld [vmem:[#allocation4] sm:$0xff]
        %v1843 = vld [vmem:[#allocation4 + $0x8] sm:$0xff]
        %v1844 = vld [vmem:[#allocation4 + $0x10] sm:$0xff]
        %v1845 = vld [vmem:[#allocation4 + $0x18] sm:$0xff]
        %v1846 = vld [vmem:[%s723] sm:$0xff]
        %v1847 = vld [vmem:[%s723 + $0x8] sm:$0xff]
        %v1848 = vld [vmem:[%s723 + $0x10] sm:$0xff]
        %v1849 = vld [vmem:[%s723 + $0x18] sm:$0xff]
        %v1851 = vsel %vm780, %v1842, 0
        %v1854 = vsel %vm780, %v1843, 0
        %v1857 = vsel %vm780, %v1844, 0
        %v1860 = vsel %vm780, %v1845, 0
        %1862 = vmatpush.msra.mxu0 0.0
        %1863 = vmatpush.msra.mxu0 0.0
        %1864 = vmatpush.msra.mxu0 0.0
        %1865 = vmatpush.msra.mxu0 0.0
        %1866 = vmatpush.msra.mxu0 0.0
        %1867 = vmatpush.msra.mxu0 0.0
        %1868 = vmatpush.msra.mxu0 0.0
        %1869 = vmatpush.msra.mxu0 0.0
        %1870 = vmatpush.msra.mxu0 0.0
        %1871 = vmatpush.msra.mxu0 0.0
        %1872 = vmatpush.msra.mxu0 0.0
        %1873 = vmatpush.msra.mxu0 0.0
        %1874 = vmatpush.msra.mxu0 %v1849
        %1875 = vmatpush.msra.mxu0 %v1848
        %1876 = vmatpush.msra.mxu0 %v1847
        %1877 = vmatpush.msra.mxu0 %v1846
        %1878 = vmatmul.f32.gmra.mxu0 %v1851
        %v1879 = vpop.f32.mrf.mxu0
        %v1880 = vadd.f32 0.0, %v1879
        %1881 = vmatmul.f32.gmra.mxu0 %v1854
        %v1882 = vpop.f32.mrf.mxu0
        %v1883 = vadd.f32 0.0, %v1882
        %1884 = vmatmul.f32.gmra.mxu0 %v1857
        %v1885 = vpop.f32.mrf.mxu0
        %v1886 = vadd.f32 0.0, %v1885
        %1887 = vmatmul.f32.gmra.mxu0 %v1860
        %v1888 = vpop.f32.mrf.mxu0
        %v1889 = vadd.f32 0.0, %v1888
        %1890 = vdwg.mxu0
        %v1891 = vadd.f32 %v772, %v1880
        %v1892 = vadd.f32 %v773, %v1883
        %v1893 = vadd.f32 %v774, %v1886
        %v1894 = vadd.f32 %v775, %v1889
        %v1895 = vld [vmem:[%s726] sm:$0x1]
        %v1897 = vperm.slane %v1895, 0
        %v1899 = vadd.f32 %v1891, %v1897
        %v1900 = vadd.f32 %v1892, %v1897
        %v1901 = vadd.f32 %v1893, %v1897
        %v1902 = vadd.f32 %v1894, %v1897
        %v1903 = vsel %vm780, %v1899, 0.0
        %1904 = vadd.xlane.f32.xlu0 %v1903
        %v1905 = vpop.xlane.xlu0 %1904
        %v1906 = vsel %vm780, %v1900, 0.0
        %1907 = vadd.xlane.f32.xlu0 %v1906
        %v1908 = vpop.xlane.xlu0 %1907
        %v1909 = vsel %vm780, %v1901, 0.0
        %1910 = vadd.xlane.f32.xlu0 %v1909
        %v1911 = vpop.xlane.xlu0 %1910
        %v1912 = vsel %vm780, %v1902, 0.0
        %1913 = vadd.xlane.f32.xlu0 %v1912
        %v1914 = vpop.xlane.xlu0 %1913
        %v1915 = vmul.f32 %v1905, %v799
        %v1916 = vmul.f32 %v1908, %v799
        %v1917 = vmul.f32 %v1911, %v799
        %v1918 = vmul.f32 %v1914, %v799
        %v1919 = vsub.f32 %v1899, %v1915
        %v1920 = vsub.f32 %v1900, %v1916
        %v1921 = vsub.f32 %v1901, %v1917
        %v1922 = vsub.f32 %v1902, %v1918
        %v1923 = vmul.f32 %v1919, %v1919
        %v1924 = vmul.f32 %v1920, %v1920
        %v1925 = vmul.f32 %v1921, %v1921
        %v1926 = vmul.f32 %v1922, %v1922
        %v1927 = vsel %vm780, %v1923, 0.0
        %1928 = vadd.xlane.f32.xlu0 %v1927
        %v1929 = vpop.xlane.xlu0 %1928
        %v1930 = vsel %vm780, %v1924, 0.0
        %1931 = vadd.xlane.f32.xlu0 %v1930
        %v1932 = vpop.xlane.xlu0 %1931
        %v1933 = vsel %vm780, %v1925, 0.0
        %1934 = vadd.xlane.f32.xlu0 %v1933
        %v1935 = vpop.xlane.xlu0 %1934
        %v1936 = vsel %vm780, %v1926, 0.0
        %1937 = vadd.xlane.f32.xlu0 %v1936
        %v1938 = vpop.xlane.xlu0 %1937
        %v1939 = vmul.f32 %v1929, %v799
        %v1940 = vmul.f32 %v1932, %v799
        %v1941 = vmul.f32 %v1935, %v799
        %v1942 = vmul.f32 %v1938, %v799
        %v1943 = vadd.f32 %v1939, 1e-05
        %v1944 = vadd.f32 %v1940, 1e-05
        %v1945 = vadd.f32 %v1941, 1e-05
        %v1946 = vadd.f32 %v1942, 1e-05
        %v1947 = vrsqrt.pop %v1943
        %v1948 = vmul.f32 %v1947, %v1943
        %v1949 = vmul.f32 %v1948, %v1947
        %v1950 = vmul.f32 0.5, %v1949
        %v1951 = vsub.f32 1.5, %v1950
        %v1952 = vmul.f32 %v1947, %v1951
        %vm1953 = vweird.f32 %v1943
        %vm1954 = vweird.f32 %v1947
        %vm1955 = vmor %vm1953, %vm1954
        %v1956 = vsel %vm1955, %v1947, %v1952
        %v1957 = vrsqrt.pop %v1944
        %v1958 = vmul.f32 %v1957, %v1944
        %v1959 = vmul.f32 %v1958, %v1957
        %v1960 = vmul.f32 0.5, %v1959
        %v1961 = vsub.f32 1.5, %v1960
        %v1962 = vmul.f32 %v1957, %v1961
        %vm1963 = vweird.f32 %v1944
        %vm1964 = vweird.f32 %v1957
        %vm1965 = vmor %vm1963, %vm1964
        %v1966 = vsel %vm1965, %v1957, %v1962
        %v1967 = vrsqrt.pop %v1945
        %v1968 = vmul.f32 %v1967, %v1945
        %v1969 = vmul.f32 %v1968, %v1967
        %v1970 = vmul.f32 0.5, %v1969
        %v1971 = vsub.f32 1.5, %v1970
        %v1972 = vmul.f32 %v1967, %v1971
        %vm1973 = vweird.f32 %v1945
        %vm1974 = vweird.f32 %v1967
        %vm1975 = vmor %vm1973, %vm1974
        %v1976 = vsel %vm1975, %v1967, %v1972
        %v1977 = vrsqrt.pop %v1946
        %v1978 = vmul.f32 %v1977, %v1946
        %v1979 = vmul.f32 %v1978, %v1977
        %v1980 = vmul.f32 0.5, %v1979
        %v1981 = vsub.f32 1.5, %v1980
        %v1982 = vmul.f32 %v1977, %v1981
        %vm1983 = vweird.f32 %v1946
        %vm1984 = vweird.f32 %v1977
        %vm1985 = vmor %vm1983, %vm1984
        %v1986 = vsel %vm1985, %v1977, %v1982
        %v1987 = vmul.f32 %v1919, %v1956
        %v1988 = vmul.f32 %v1920, %v1966
        %v1989 = vmul.f32 %v1921, %v1976
        %v1990 = vmul.f32 %v1922, %v1986
        %v1992 = vperm.slane %v778, 0
        %v1994 = vmul.f32 %v1987, %v1992
        %v1995 = vmul.f32 %v1988, %v1992
        %v1996 = vmul.f32 %v1989, %v1992
        %v1997 = vmul.f32 %v1990, %v1992
        %v1999 = vperm.slane %v779, 0
        %v2001 = vadd.f32 %v1994, %v1999
        %v2002 = vadd.f32 %v1995, %v1999
        %v2003 = vadd.f32 %v1996, %v1999
        %v2004 = vadd.f32 %v1997, %v1999
        %v2005 = vld [vmem:[%s737] sm:$0xff]
        %v2006 = vld [vmem:[%s737 + $0x8] sm:$0xff]
        %v2007 = vld [vmem:[%s737 + $0x10] sm:$0xff]
        %v2008 = vld [vmem:[%s737 + $0x18] sm:$0xff]
        %v2009 = vld [vmem:[%s740] sm:$0x1]
        %v2011 = vperm.slane %v2009, 0
        %v2014 = vsel %vm780, %v2001, 0
        %v2017 = vsel %vm780, %v2002, 0
        %v2020 = vsel %vm780, %v2003, 0
        %v2023 = vsel %vm780, %v2004, 0
        %2025 = vmatpush.msra.mxu0 0.0
        %2026 = vmatpush.msra.mxu0 0.0
        %2027 = vmatpush.msra.mxu0 0.0
        %2028 = vmatpush.msra.mxu0 0.0
        %2029 = vmatpush.msra.mxu0 0.0
        %2030 = vmatpush.msra.mxu0 0.0
        %2031 = vmatpush.msra.mxu0 0.0
        %2032 = vmatpush.msra.mxu0 0.0
        %2033 = vmatpush.msra.mxu0 0.0
        %2034 = vmatpush.msra.mxu0 0.0
        %2035 = vmatpush.msra.mxu0 0.0
        %2036 = vmatpush.msra.mxu0 0.0
        %2037 = vmatpush.msra.mxu0 %v2008
        %2038 = vmatpush.msra.mxu0 %v2007
        %2039 = vmatpush.msra.mxu0 %v2006
        %2040 = vmatpush.msra.mxu0 %v2005
        %2041 = vmatmul.f32.gmra.mxu0 %v2014
        %v2042 = vpop.f32.mrf.mxu0
        %v2043 = vadd.f32 %v2011, %v2042
        %2044 = vmatmul.f32.gmra.mxu0 %v2017
        %v2045 = vpop.f32.mrf.mxu0
        %v2046 = vadd.f32 %v2011, %v2045
        %2047 = vmatmul.f32.gmra.mxu0 %v2020
        %v2048 = vpop.f32.mrf.mxu0
        %v2049 = vadd.f32 %v2011, %v2048
        %2050 = vmatmul.f32.gmra.mxu0 %v2023
        %v2051 = vpop.f32.mrf.mxu0
        %v2052 = vadd.f32 %v2011, %v2051
        %2053 = vdwg.mxu0
        %v2054 = vmax.f32 %v2043, 0.0
        %v2055 = vmax.f32 %v2046, 0.0
        %v2056 = vmax.f32 %v2049, 0.0
        %v2057 = vmax.f32 %v2052, 0.0
        %v2058 = vld [vmem:[%s745] sm:$0xff]
        %v2059 = vld [vmem:[%s745 + $0x8] sm:$0xff]
        %v2060 = vld [vmem:[%s745 + $0x10] sm:$0xff]
        %v2061 = vld [vmem:[%s745 + $0x18] sm:$0xff]
        %v2062 = vld [vmem:[%s745 + $0x20] sm:$0xff]
        %v2063 = vld [vmem:[%s745 + $0x28] sm:$0xff]
        %v2064 = vld [vmem:[%s745 + $0x30] sm:$0xff]
        %v2065 = vld [vmem:[%s745 + $0x38] sm:$0xff]
        %vm2066 = vcmask 523264
        %v2068 = vsel %vm2066, %v2054, 0
        %v2071 = vsel %vm2066, %v2055, 0
        %v2074 = vsel %vm2066, %v2056, 0
        %v2077 = vsel %vm2066, %v2057, 0
        %2079 = vmatpush.msra.mxu0 0.0
        %2080 = vmatpush.msra.mxu0 0.0
        %2081 = vmatpush.msra.mxu0 0.0
        %2082 = vmatpush.msra.mxu0 0.0
        %2083 = vmatpush.msra.mxu0 0.0
        %2084 = vmatpush.msra.mxu0 0.0
        %2085 = vmatpush.msra.mxu0 0.0
        %2086 = vmatpush.msra.mxu0 0.0
        %2087 = vmatpush.msra.mxu0 %v2065
        %2088 = vmatpush.msra.mxu0 %v2064
        %2089 = vmatpush.msra.mxu0 %v2063
        %2090 = vmatpush.msra.mxu0 %v2062
        %2091 = vmatpush.msra.mxu0 %v2061
        %2092 = vmatpush.msra.mxu0 %v2060
        %2093 = vmatpush.msra.mxu0 %v2059
        %2094 = vmatpush.msra.mxu0 %v2058
        %2095 = vmatmul.f32.gmra.mxu0 %v2068
        %v2096 = vpop.f32.mrf.mxu0
        %v2097 = vadd.f32 0.0, %v2096
        %2098 = vmatmul.f32.gmra.mxu0 %v2071
        %v2099 = vpop.f32.mrf.mxu0
        %v2100 = vadd.f32 0.0, %v2099
        %2101 = vmatmul.f32.gmra.mxu0 %v2074
        %v2102 = vpop.f32.mrf.mxu0
        %v2103 = vadd.f32 0.0, %v2102
        %2104 = vmatmul.f32.gmra.mxu0 %v2077
        %v2105 = vpop.f32.mrf.mxu0
        %v2106 = vadd.f32 0.0, %v2105
        %2107 = vdwg.mxu0
        %v2108 = vadd.f32 %v1899, %v2097
        %v2109 = vadd.f32 %v1900, %v2100
        %v2110 = vadd.f32 %v1901, %v2103
        %v2111 = vadd.f32 %v1902, %v2106
        %v2112 = vld [vmem:[%s748] sm:$0x1]
        %v2114 = vperm.slane %v2112, 0
        %v2116 = vadd.f32 %v2108, %v2114
        %v2117 = vadd.f32 %v2109, %v2114
        %v2118 = vadd.f32 %v2110, %v2114
        %v2119 = vadd.f32 %v2111, %v2114
        %2120 = vst.msk [vmem:[#allocation2] sm:$0xff] %vm780, %v2116
        %2121 = vst.msk [vmem:[#allocation2 + $0x8] sm:$0xff] %vm780, %v2117
        %2122 = vst.msk [vmem:[#allocation2 + $0x10] sm:$0xff] %vm780, %v2118
        %2123 = vst.msk [vmem:[#allocation2 + $0x18] sm:$0xff] %vm780, %v2119
        %p2124 = scmp.eq.s32.totalorder %s34, 1
        // Predicated region
        $region93: #{_lambda_.1} parent=87 // pred_check
          %p2125 = pneg %p2124
        $region94: #{_lambda_.1} parent=87 // pred_check_branch
          %2127 = sbr.rel (%p2125) target = $region96
        $region95: #{_lambda_.1} parent=87 // pred_region
          %v2129 = vrot.slane %v2118, 7
          %v2131 = vsel %vm1024, %v2116, %v2129
          %v2132 = vld [vmem:[%s13] sm:$0x1]
          %v2133 = vld [vmem:[%s14] sm:$0x1]
          %vm2134 = vcmask 254976
          %v2135 = vsel %vm2134, %v2131, 0.0
          %2136 = vadd.xlane.f32.xlu0 %v2135
          %v2137 = vpop.xlane.xlu0 %2136
          %v2138 = vmul.f32 %v2137, %v799
          %v2139 = vsub.f32 %v2131, %v2138
          %v2140 = vmul.f32 %v2139, %v2139
          %v2141 = vsel %vm2134, %v2140, 0.0
          %2142 = vadd.xlane.f32.xlu0 %v2141
          %v2143 = vpop.xlane.xlu0 %2142
          %v2144 = vmul.f32 %v2143, %v799
          %v2145 = vadd.f32 %v2144, 1e-05
          %v2146 = vrsqrt.pop %v2145
          %v2147 = vmul.f32 %v2146, %v2145
          %v2148 = vmul.f32 %v2147, %v2146
          %v2149 = vmul.f32 0.5, %v2148
          %v2150 = vsub.f32 1.5, %v2149
          %v2151 = vmul.f32 %v2146, %v2150
          %vm2152 = vweird.f32 %v2145
          %vm2153 = vweird.f32 %v2146
          %vm2154 = vmor %vm2152, %vm2153
          %v2155 = vsel %vm2154, %v2146, %v2151
          %v2156 = vmul.f32 %v2139, %v2155
          %v2158 = vperm.slane %v2132, 0
          %v2160 = vmul.f32 %v2156, %v2158
          %v2162 = vperm.slane %v2133, 0
          %v2164 = vadd.f32 %v2160, %v2162
          %v2165 = vmax.f32 %v2164, 0.0
          %v2166 = vld [vmem:[%s15] sm:$0xff]
          %v2167 = vld [vmem:[%s15 + $0x8] sm:$0xff]
          %v2168 = vld [vmem:[%s15 + $0x10] sm:$0xff]
          %v2169 = vld [vmem:[%s15 + $0x18] sm:$0xff]
          %v2170 = vld [vmem:[%s16] sm:$0x1]
          %v2172 = vperm.slane %v2170, 0
          %v2175 = vsel %vm780, %v2165, 0
          %2177 = vmatpush.msra.mxu0 0.0
          %2178 = vmatpush.msra.mxu0 0.0
          %2179 = vmatpush.msra.mxu0 0.0
          %2180 = vmatpush.msra.mxu0 0.0
          %2181 = vmatpush.msra.mxu0 0.0
          %2182 = vmatpush.msra.mxu0 0.0
          %2183 = vmatpush.msra.mxu0 0.0
          %2184 = vmatpush.msra.mxu0 0.0
          %2185 = vmatpush.msra.mxu0 0.0
          %2186 = vmatpush.msra.mxu0 0.0
          %2187 = vmatpush.msra.mxu0 0.0
          %2188 = vmatpush.msra.mxu0 0.0
          %2189 = vmatpush.msra.mxu0 %v2169
          %2190 = vmatpush.msra.mxu0 %v2168
          %2191 = vmatpush.msra.mxu0 %v2167
          %2192 = vmatpush.msra.mxu0 %v2166
          %2193 = vmatmul.f32.gmra.mxu0 %v2175
          %v2194 = vpop.f32.mrf.mxu0
          %v2195 = vadd.f32 %v2172, %v2194
          %2196 = vdwg.mxu0
          %vm2197 = vcmask 123904
          %2198 = vst.msk [vmem:[#allocation5] sm:$0x3] %vm2197, %v2195
        $region96: #{_lambda_.1} parent=87 // pred_fallthru
          _
        // Predicated region
        $region97: #{_lambda_.1} parent=87 // pred_check
          %p2199 = pneg %p481
        $region98: #{_lambda_.1} parent=87 // pred_check_branch
          %2201 = sbr.rel (%p2199) target = $region100
        $region99: #{_lambda_.1} parent=87 // pred_region
          %2203 = vsyncadd [#allocation6], 0
          %s2204 = smul.addr %s33, 2
          %s2205 = scalar_lea.hbm %s17, %s2204
          %s2207 = sshll.u32 [#allocation5], 4
          %s2208 = int_to_ptr.vmem [resolvable:$true] %s2207
          %s2209 = sshll.u32 %s2205, 4
          %s2210 = int_to_ptr.hbm [resolvable:$true] %s2209
          %2212 = dma.vmem_to_hbm [thread:$0]  %s2208, 32, %s2210, [#allocation6]
        $region100: #{_lambda_.1} parent=87 // pred_fallthru
          _
        // Predicated region
        $region101: #{_lambda_.1} parent=87 // pred_check
          %p2213 = pneg %p481
        $region102: #{_lambda_.1} parent=87 // pred_check_branch
          %2215 = sbr.rel (%p2213) target = $region104
        $region103: #{_lambda_.1} parent=87 // pred_region
          %2217 = dma.done [#allocation6], 32
        $region104: #{_lambda_.1} parent=87 // pred_fallthru
          _
      $region88: #{_lambda_.1} parent=5 // pred_fallthru
        _
      %p2218 = scmp.le.s32.totalorder 2, %s24
      // Predicated region
      $region105: #{_lambda_.1} parent=5 // pred_check
        %p2219 = pneg %p2218
      $region106: #{_lambda_.1} parent=5 // pred_check_branch
        %2221 = sbr.rel (%p2219) target = $region108
      $region107: #{_lambda_.1} parent=5 // pred_region
        %s2222 = ssub.s32 %s24, 2
      $region108: #{_lambda_.1} parent=5 // pred_fallthru
        _
    $region6: #{_lambda_.1} parent=1 // loop_footer
      %s28 = sadd.s32 1, %s24
    $region7: #{_lambda_.1} parent=1 // loop_footer_branch
      %23 = sbr.rel target = $region3
    $region8: #{_lambda_.1} parent=1 // loop_exit
      _
    %2223 = vsyncpa [#allocation6], 1
    %s2224 = scalar_lea.sflag [#allocation6], 1
    %2225 = vsyncpa %s2224, 1

</llo_original>
